<compile_context>
chip_gen: v7x
topology: tpu7x:2x2x1
jax: 0.10.0
libtpu: 0.0.40
codegen_flags: <defaults>
</compile_context>

<pallas_src>
import functools

import jax
import jax.numpy as jnp
from jax import lax
from jax.experimental import pallas as pl
from jax.experimental.pallas import tpu as pltpu

# AULoss.__init__ defaults -- no learnable parameters.
ALPHA = 2      # exponent on the align norm (kernel hard-codes alpha=2)
T = 2.0        # temperature of the uniformity term
TAU = 1.0      # weight on the uniformity term
NUM_CORES = 2  # leading "parallel" grid axis; ~2x on 2-TC chips (v7x), benign on 1-TC
_NEG_BIG = -1.0e30   # padded-row sentinel: exp(arg) underflows to exactly 0
# TODO(synk): alpha != 2 would need an extra pow on the per-row align norm.


def _round_up(v, m):
    return (v + m - 1) // m * m


def _make_kernel(tile_n):
    def kernel(ti_ref, tj_ref, tv_ref,
               xr_ref, xc_ref, yr_ref, yc_ref,
               nxr_ref, nxc_ref, nyr_ref, nyc_ref,
               out_ref, acc_a_ref, acc_x_ref, acc_y_ref):
        c = pl.program_id(0)           # core-split axis (parallel)
        s = pl.program_id(1)           # tile-pair step (sequential per core)
        i = ti_ref[c, s]
        j = tj_ref[c, s]
        valid = tv_ref[c, s] == 1      # padded steps (odd tile counts) are skipped
        diag = i == j

        @pl.when(s == 0)
        def _init():
            acc_a_ref[...] = jnp.zeros_like(acc_a_ref)   # align partial sums
            acc_x_ref[...] = jnp.zeros_like(acc_x_ref)   # sum exp(-t d2), x pairs
            acc_y_ref[...] = jnp.zeros_like(acc_y_ref)   # sum exp(-t d2), y pairs

        xr = xr_ref[...]
        xc = xc_ref[...]
        yr = yr_ref[...]
        yc = yc_ref[...]

        # Gram tiles on the MXU: contract the feature dim of both operands
        # directly (no explicit transpose), f32 accumulation.
        dn = (((1,), (1,)), ((), ()))
        gx = lax.dot_general(xr, xc, dimension_numbers=dn,
                             preferred_element_type=jnp.float32)
        gy = lax.dot_general(yr, yc, dimension_numbers=dn,
                             preferred_element_type=jnp.float32)

        # arg = -t||zi||^2 - t||zj||^2 + 2t<zi,zj> = -t*d2  (<= 0 mathematically).
        two_t = 2.0 * T
        ax = jnp.minimum(nxr_ref[...] + nxc_ref[...] + two_t * gx, 0.0)
        ay = jnp.minimum(nyr_ref[...] + nyc_ref[...] + two_t * gy, 0.0)
        ex = jnp.exp(ax)
        ey = jnp.exp(ay)

        @pl.when(valid & diag)
        def _diag_tile():
            # Same row/col tile: drop self pairs, halve the symmetric double
            # count, and fold in this row tile's align contribution.
            r = lax.broadcasted_iota(jnp.int32, (tile_n, tile_n), 0)
            cc = lax.broadcasted_iota(jnp.int32, (tile_n, tile_n), 1)
            off = r != cc
            acc_x_ref[...] += 0.5 * jnp.sum(jnp.where(off, ex, 0.0),
                                            axis=0, keepdims=True)
            acc_y_ref[...] += 0.5 * jnp.sum(jnp.where(off, ey, 0.0),
                                            axis=0, keepdims=True)
            d = xr.astype(jnp.float32) - yr.astype(jnp.float32)
            acc_a_ref[...] += jnp.sum(d * d, axis=0, keepdims=True)

        @pl.when(valid & jnp.logical_not(diag))
        def _off_tile():
            acc_x_ref[...] += jnp.sum(ex, axis=0, keepdims=True)
            acc_y_ref[...] += jnp.sum(ey, axis=0, keepdims=True)

        @pl.when(s == pl.num_programs(1) - 1)
        def _finalize():
            a_sum = jnp.sum(acc_a_ref[...])
            x_sum = jnp.sum(acc_x_ref[...])
            y_sum = jnp.sum(acc_y_ref[...])
            sub = lax.broadcasted_iota(jnp.int32, (1, 8, 128), 1)
            out_ref[...] = jnp.where(
                sub == 0, a_sum,
                jnp.where(sub == 1, x_sum,
                          jnp.where(sub == 2, y_sum, 0.0)))

    return kernel


def _choose_tile(d_pad, itemsize, tile_n, vmem_budget):
    # Largest lane-aligned tile whose working set fits the per-core budget.
    def est(tn):
        return 8 * tn * d_pad * itemsize + 6 * tn * tn * 4 + (2 << 20)
    candidates = sorted({max(128, _round_up(int(tile_n), 128)), 512, 256, 128},
                        reverse=True)
    for cand in candidates:
        if est(cand) <= vmem_budget:
            return cand
    return 128


@functools.partial(jax.jit, static_argnames=("tile_n",))
def auloss(x, y, *, tile_n=512):
    """x, y: (N, D) arrays (f32 or bf16). Returns scalar float32 loss."""
    assert x.ndim == 2 and x.shape == y.shape
    n, d = x.shape
    assert n >= 2, "AULoss uniformity term needs at least 2 samples"

    itemsize = jnp.dtype(x.dtype).itemsize
    d_pad = _round_up(d, 128)                       # lane-dense feature dim

    try:
        info = pltpu.get_tpu_info()
        vmem_cap = int(getattr(info, "vmem_capacity_bytes", 64 * 1024 * 1024))
    except Exception:
        vmem_cap = 64 * 1024 * 1024                 # v7x-conservative fallback
    vmem_budget = vmem_cap * 3 // 4                 # leave pipelining headroom

    tn_cap = _choose_tile(d_pad, itemsize, tile_n, vmem_budget)
    tn = min(tn_cap, _round_up(n, 8))               # sublane-aligned row tile
    n_pad = _round_up(n, tn)
    nt = n_pad // tn

    # Precompute -t * ||z||^2 in f32; padded entries get a huge negative
    # sentinel so padded pairs vanish under exp() with no in-kernel masking.
    xf = x.astype(jnp.float32)
    yf = y.astype(jnp.float32)
    nx = -T * jnp.sum(xf * xf, axis=1)
    ny = -T * jnp.sum(yf * yf, axis=1)
    if n_pad != n:
        sent = jnp.full((n_pad - n,), _NEG_BIG, jnp.float32)
        nx = jnp.concatenate([nx, sent])
        ny = jnp.concatenate([ny, sent])
    nx_row, nx_col = nx[:, None], nx[None, :]
    ny_row, ny_col = ny[:, None], ny[None, :]

    if n_pad != n or d_pad != d:
        pad = ((0, n_pad - n), (0, d_pad - d))      # zero pad: align diffs stay 0
        x = jnp.pad(x, pad)
        y = jnp.pad(y, pad)

    # Upper-triangle tile pairs (j >= i), round-robined across the core axis.
    tiles = [(ii, jj) for ii in range(nt) for jj in range(ii, nt)]
    per_core = [tiles[cidx::NUM_CORES] for cidx in range(NUM_CORES)]
    steps = max(len(p) for p in per_core)
    ti, tj, tv = [], [], []
    for p in per_core:
        pad_len = steps - len(p)
        full = p + [p[-1] if p else (0, 0)] * pad_len
        ti.append([a for a, _ in full])
        tj.append([b for _, b in full])
        tv.append([1] * len(p) + [0] * pad_len)
    ti = jnp.asarray(ti, dtype=jnp.int32)
    tj = jnp.asarray(tj, dtype=jnp.int32)
    tv = jnp.asarray(tv, dtype=jnp.int32)

    row_spec = pl.BlockSpec((tn, d_pad), lambda c, s, ti_r, tj_r, tv_r: (ti_r[c, s], 0))
    col_spec = pl.BlockSpec((tn, d_pad), lambda c, s, ti_r, tj_r, tv_r: (tj_r[c, s], 0))
    nrow_spec = pl.BlockSpec((tn, 1), lambda c, s, ti_r, tj_r, tv_r: (ti_r[c, s], 0))
    ncol_spec = pl.BlockSpec((1, tn), lambda c, s, ti_r, tj_r, tv_r: (0, tj_r[c, s]))

    est = (8 * tn * d_pad * itemsize + 6 * tn * tn * 4
           + (2 * tn + d_pad) * 4 + (4 << 20))
    vmem_limit = int(min(vmem_budget, max(32 * 1024 * 1024, est)))

    parts = pl.pallas_call(
        _make_kernel(tn),
        out_shape=jax.ShapeDtypeStruct((NUM_CORES, 8, 128), jnp.float32),
        grid_spec=pltpu.PrefetchScalarGridSpec(
            num_scalar_prefetch=3,
            grid=(NUM_CORES, steps),
            in_specs=[row_spec, col_spec, row_spec, col_spec,
                      nrow_spec, ncol_spec, nrow_spec, ncol_spec],
            out_specs=pl.BlockSpec((1, 8, 128),
                                   lambda c, s, ti_r, tj_r, tv_r: (c, 0, 0)),
            scratch_shapes=[
                pltpu.VMEM((1, d_pad), jnp.float32),   # align partial sums
                pltpu.VMEM((1, tn), jnp.float32),      # sum exp (x) partials
                pltpu.VMEM((1, tn), jnp.float32),      # sum exp (y) partials
            ],
        ),
        compiler_params=pltpu.CompilerParams(
            dimension_semantics=("parallel", "arbitrary"),
            vmem_limit_bytes=vmem_limit,
        ),
    )(ti, tj, tv, x, x, y, y, nx_row, nx_col, ny_row, ny_col)

    align_sum = jnp.sum(parts[:, 0, 0])
    sx = jnp.sum(parts[:, 1, 0])
    sy = jnp.sum(parts[:, 2, 0])
    num_pairs = float(n * (n - 1) // 2)
    align = align_sum / float(n)
    uniform = jnp.log(sx / num_pairs) + jnp.log(sy / num_pairs)
    return align + TAU * uniform


def _auloss_ref(x, y):
    # Pure-JAX reference (mirrors the PyTorch module) for a correctness check.
    x = x.astype(jnp.float32)
    y = y.astype(jnp.float32)
    n = x.shape[0]
    align = jnp.mean(jnp.sum((x - y) ** 2, axis=1) ** (ALPHA / 2))

    def uniform(z):
        d2 = jnp.sum((z[:, None, :] - z[None, :, :]) ** 2, axis=-1)
        iu = jnp.triu_indices(n, k=1)
        return jnp.log(jnp.mean(jnp.exp(-T * d2[iu])))

    return align + TAU * (uniform(x) + uniform(y))


if __name__ == "__main__":
    key = jax.random.PRNGKey(0)
    k1, k2 = jax.random.split(key)
    N, D = 8, 32                      # batch of 8 embeddings, feature dim 32
    x = jax.random.normal(k1, (N, D), dtype=jnp.float32)
    y = jax.random.normal(k2, (N, D), dtype=jnp.float32)
    # BYOL-style usage feeds L2-normalized projections; this also keeps the
    # pairwise exp(-t*d2) terms comfortably inside f32 range.
    x = x / jnp.linalg.norm(x, axis=1, keepdims=True)
    y = y / jnp.linalg.norm(y, axis=1, keepdims=True)

    out = auloss(x, y)
    jax.block_until_ready(out)

    ref = _auloss_ref(x, y)
    assert jnp.allclose(out, ref, rtol=1e-4, atol=1e-4), (out, ref)

    print("KERNEL_OK")
</pallas_src>

<mosaic_0001>
module attributes {stable_mosaic.version = 11 : i64} {
  func.func @kernel(%arg0: i32, %arg1: i32, %arg2: memref<2x1xi32, #tpu.memory_space<smem>>, %arg3: memref<2x1xi32, #tpu.memory_space<smem>>, %arg4: memref<2x1xi32, #tpu.memory_space<smem>>, %arg5: memref<8x128xf32, #tpu.memory_space<vmem>>, %arg6: memref<8x128xf32, #tpu.memory_space<vmem>>, %arg7: memref<8x128xf32, #tpu.memory_space<vmem>>, %arg8: memref<8x128xf32, #tpu.memory_space<vmem>>, %arg9: memref<8x1xf32, #tpu.memory_space<vmem>>, %arg10: memref<1x8xf32, #tpu.memory_space<vmem>>, %arg11: memref<8x1xf32, #tpu.memory_space<vmem>>, %arg12: memref<1x8xf32, #tpu.memory_space<vmem>>, %arg13: memref<1x8x128xf32, #tpu.memory_space<vmem>>, %arg14: memref<1x128xf32, #tpu.memory_space<vmem>>, %arg15: memref<1x8xf32, #tpu.memory_space<vmem>>, %arg16: memref<1x8xf32, #tpu.memory_space<vmem>>) attributes {dimension_semantics = [#tpu.dimension_semantics<parallel>, #tpu.dimension_semantics<arbitrary>], iteration_bounds = array<i64: 2, 1>, scalar_prefetch = 3 : i64, scratch_operands = 3 : i64, tpu.core_type = #tpu.core_type<tc>, window_params = [{transform_indices = @transform_0, window_bounds = array<i64: 8, 128>}, {transform_indices = @transform_1, window_bounds = array<i64: 8, 128>}, {transform_indices = @transform_2, window_bounds = array<i64: 8, 128>}, {transform_indices = @transform_3, window_bounds = array<i64: 8, 128>}, {transform_indices = @transform_4, window_bounds = array<i64: 8, 1>}, {transform_indices = @transform_5, window_bounds = array<i64: 1, 8>}, {transform_indices = @transform_6, window_bounds = array<i64: 8, 1>}, {transform_indices = @transform_7, window_bounds = array<i64: 1, 8>}, {transform_indices = @transform_8, window_bounds = array<i64: 1, 8, 128>}]} {
    %0 = arith.index_cast %arg0 : i32 to index
    %1 = arith.index_cast %arg1 : i32 to index
    %2 = memref.load %arg2[%0, %1] : memref<2x1xi32, #tpu.memory_space<smem>>
    %3 = arith.index_cast %arg0 : i32 to index
    %4 = arith.index_cast %arg1 : i32 to index
    %5 = memref.load %arg3[%3, %4] : memref<2x1xi32, #tpu.memory_space<smem>>
    %6 = arith.index_cast %arg0 : i32 to index
    %7 = arith.index_cast %arg1 : i32 to index
    %8 = memref.load %arg4[%6, %7] : memref<2x1xi32, #tpu.memory_space<smem>>
    %c1_i32 = arith.constant 1 : i32
    %9 = arith.cmpi eq, %8, %c1_i32 : i32
    %10 = arith.cmpi eq, %2, %5 : i32
    %c0_i32 = arith.constant 0 : i32
    %11 = arith.cmpi eq, %arg1, %c0_i32 : i32
    %12 = arith.extui %11 : i1 to i32
    %c0_i32_0 = arith.constant 0 : i32
    %13 = arith.cmpi ne, %12, %c0_i32_0 : i32
    scf.if %13 {
      %cst_25 = arith.constant 0.000000e+00 : f32
      %52 = vector.broadcast %cst_25 : f32 to vector<1x128xf32>
      %c0_26 = arith.constant 0 : index
      %c0_27 = arith.constant 0 : index
      %53 = vector.load %arg14[%c0_26, %c0_27] : memref<1x128xf32, #tpu.memory_space<vmem>>, vector<1x128xf32>
      tpu.vector_store %arg14[%c0_26, %c0_27], %52 {strides = array<i32>} : memref<1x128xf32, #tpu.memory_space<vmem>>, vector<1x128xf32>,
      %cst_28 = arith.constant 0.000000e+00 : f32
      %54 = vector.broadcast %cst_28 : f32 to vector<1x8xf32>
      %c0_29 = arith.constant 0 : index
      %c0_30 = arith.constant 0 : index
      %55 = vector.load %arg15[%c0_29, %c0_30] : memref<1x8xf32, #tpu.memory_space<vmem>>, vector<1x8xf32>
      tpu.vector_store %arg15[%c0_29, %c0_30], %54 {strides = array<i32>} : memref<1x8xf32, #tpu.memory_space<vmem>>, vector<1x8xf32>,
      %cst_31 = arith.constant 0.000000e+00 : f32
      %56 = vector.broadcast %cst_31 : f32 to vector<1x8xf32>
      %c0_32 = arith.constant 0 : index
      %c0_33 = arith.constant 0 : index
      %57 = vector.load %arg16[%c0_32, %c0_33] : memref<1x8xf32, #tpu.memory_space<vmem>>, vector<1x8xf32>
      tpu.vector_store %arg16[%c0_32, %c0_33], %56 {strides = array<i32>} : memref<1x8xf32, #tpu.memory_space<vmem>>, vector<1x8xf32>,
    } else {
    }
    %c0 = arith.constant 0 : index
    %c0_1 = arith.constant 0 : index
    %14 = vector.load %arg5[%c0, %c0_1] : memref<8x128xf32, #tpu.memory_space<vmem>>, vector<8x128xf32>
    %c0_2 = arith.constant 0 : index
    %c0_3 = arith.constant 0 : index
    %15 = vector.load %arg6[%c0_2, %c0_3] : memref<8x128xf32, #tpu.memory_space<vmem>>, vector<8x128xf32>
    %c0_4 = arith.constant 0 : index
    %c0_5 = arith.constant 0 : index
    %16 = vector.load %arg7[%c0_4, %c0_5] : memref<8x128xf32, #tpu.memory_space<vmem>>, vector<8x128xf32>
    %c0_6 = arith.constant 0 : index
    %c0_7 = arith.constant 0 : index
    %17 = vector.load %arg8[%c0_6, %c0_7] : memref<8x128xf32, #tpu.memory_space<vmem>>, vector<8x128xf32>
    %cst = arith.constant dense<0.000000e+00> : vector<8x8xf32>
    %18 = tpu.matmul %14, %15, %cst {dimension_numbers = #tpu.dot_dimension_numbers<[1], [1], [0], [0], [0, 0, 1, 0], [], []>} : vector<8x128xf32>, vector<8x128xf32>, vector<8x8xf32> -> vector<8x8xf32>
    %cst_8 = arith.constant dense<0.000000e+00> : vector<8x8xf32>
    %19 = tpu.matmul %16, %17, %cst_8 {dimension_numbers = #tpu.dot_dimension_numbers<[1], [1], [0], [0], [0, 0, 1, 0], [], []>} : vector<8x128xf32>, vector<8x128xf32>, vector<8x8xf32> -> vector<8x8xf32>
    %c0_9 = arith.constant 0 : index
    %c0_10 = arith.constant 0 : index
    %20 = vector.load %arg9[%c0_9, %c0_10] : memref<8x1xf32, #tpu.memory_space<vmem>>, vector<8x1xf32>
    %c0_11 = arith.constant 0 : index
    %c0_12 = arith.constant 0 : index
    %21 = vector.load %arg10[%c0_11, %c0_12] : memref<1x8xf32, #tpu.memory_space<vmem>>, vector<1x8xf32>
    %22 = vector.broadcast %20 : vector<8x1xf32> to vector<8x8xf32>
    %23 = vector.broadcast %21 : vector<1x8xf32> to vector<8x8xf32>
    %24 = arith.addf %22, %23 : vector<8x8xf32>
    %cst_13 = arith.constant 4.000000e+00 : f32
    %25 = vector.broadcast %cst_13 : f32 to vector<8x8xf32>
    %26 = arith.mulf %25, %18 : vector<8x8xf32>
    %27 = arith.addf %24, %26 : vector<8x8xf32>
    %cst_14 = arith.constant 0.000000e+00 : f32
    %28 = vector.broadcast %cst_14 : f32 to vector<8x8xf32>
    %29 = arith.minimumf %27, %28 : vector<8x8xf32>
    %c0_15 = arith.constant 0 : index
    %c0_16 = arith.constant 0 : index
    %30 = vector.load %arg11[%c0_15, %c0_16] : memref<8x1xf32, #tpu.memory_space<vmem>>, vector<8x1xf32>
    %c0_17 = arith.constant 0 : index
    %c0_18 = arith.constant 0 : index
    %31 = vector.load %arg12[%c0_17, %c0_18] : memref<1x8xf32, #tpu.memory_space<vmem>>, vector<1x8xf32>
    %32 = vector.broadcast %30 : vector<8x1xf32> to vector<8x8xf32>
    %33 = vector.broadcast %31 : vector<1x8xf32> to vector<8x8xf32>
    %34 = arith.addf %32, %33 : vector<8x8xf32>
    %cst_19 = arith.constant 4.000000e+00 : f32
    %35 = vector.broadcast %cst_19 : f32 to vector<8x8xf32>
    %36 = arith.mulf %35, %19 : vector<8x8xf32>
    %37 = arith.addf %34, %36 : vector<8x8xf32>
    %cst_20 = arith.constant 0.000000e+00 : f32
    %38 = vector.broadcast %cst_20 : f32 to vector<8x8xf32>
    %39 = arith.minimumf %37, %38 : vector<8x8xf32>
    %40 = math.exp %29 : vector<8x8xf32>
    %41 = math.exp %39 : vector<8x8xf32>
    %42 = arith.andi %9, %10 : i1
    %43 = arith.extui %42 : i1 to i32
    %c0_i32_21 = arith.constant 0 : i32
    %44 = arith.cmpi ne, %43, %c0_i32_21 : i32
    scf.if %44 {
      %52 = tpu.iota {dimensions = array<i32: 0>} : vector<8x8xi32>
      %53 = tpu.iota {dimensions = array<i32: 1>} : vector<8x8xi32>
      %54 = arith.cmpi ne, %52, %53 : vector<8x8xi32>
      %c0_25 = arith.constant 0 : index
      %c0_26 = arith.constant 0 : index
      %55 = vector.load %arg15[%c0_25, %c0_26] : memref<1x8xf32, #tpu.memory_space<vmem>>, vector<1x8xf32>
      %cst_27 = arith.constant 0.000000e+00 : f32
      %56 = vector.broadcast %cst_27 : f32 to vector<8x8xf32>
      %57 = arith.select %54, %40, %56 : vector<8x8xi1>, vector<8x8xf32>
      %cst_28 = arith.constant dense<0.000000e+00> : vector<8xf32>
      %58 = vector.multi_reduction <add>, %57, %cst_28 [0] : vector<8x8xf32> to vector<8xf32>
      %59 = vector.shape_cast %58 : vector<8xf32> to vector<1x8xf32>
      %cst_29 = arith.constant 5.000000e-01 : f32
      %60 = vector.broadcast %cst_29 : f32 to vector<1x8xf32>
      %61 = arith.mulf %60, %59 : vector<1x8xf32>
      %62 = arith.addf %55, %61 : vector<1x8xf32>
      %c0_30 = arith.constant 0 : index
      %c0_31 = arith.constant 0 : index
      %63 = vector.load %arg15[%c0_30, %c0_31] : memref<1x8xf32, #tpu.memory_space<vmem>>, vector<1x8xf32>
      tpu.vector_store %arg15[%c0_30, %c0_31], %62 {strides = array<i32>} : memref<1x8xf32, #tpu.memory_space<vmem>>, vector<1x8xf32>,
      %c0_32 = arith.constant 0 : index
      %c0_33 = arith.constant 0 : index
      %64 = vector.load %arg16[%c0_32, %c0_33] : memref<1x8xf32, #tpu.memory_space<vmem>>, vector<1x8xf32>
      %cst_34 = arith.constant 0.000000e+00 : f32
      %65 = vector.broadcast %cst_34 : f32 to vector<8x8xf32>
      %66 = arith.select %54, %41, %65 : vector<8x8xi1>, vector<8x8xf32>
      %cst_35 = arith.constant dense<0.000000e+00> : vector<8xf32>
      %67 = vector.multi_reduction <add>, %66, %cst_35 [0] : vector<8x8xf32> to vector<8xf32>
      %68 = vector.shape_cast %67 : vector<8xf32> to vector<1x8xf32>
      %cst_36 = arith.constant 5.000000e-01 : f32
      %69 = vector.broadcast %cst_36 : f32 to vector<1x8xf32>
      %70 = arith.mulf %69, %68 : vector<1x8xf32>
      %71 = arith.addf %64, %70 : vector<1x8xf32>
      %c0_37 = arith.constant 0 : index
      %c0_38 = arith.constant 0 : index
      %72 = vector.load %arg16[%c0_37, %c0_38] : memref<1x8xf32, #tpu.memory_space<vmem>>, vector<1x8xf32>
      tpu.vector_store %arg16[%c0_37, %c0_38], %71 {strides = array<i32>} : memref<1x8xf32, #tpu.memory_space<vmem>>, vector<1x8xf32>,
      %73 = arith.subf %14, %16 : vector<8x128xf32>
      %c0_39 = arith.constant 0 : index
      %c0_40 = arith.constant 0 : index
      %74 = vector.load %arg14[%c0_39, %c0_40] : memref<1x128xf32, #tpu.memory_space<vmem>>, vector<1x128xf32>
      %75 = arith.mulf %73, %73 : vector<8x128xf32>
      %cst_41 = arith.constant dense<0.000000e+00> : vector<128xf32>
      %76 = vector.multi_reduction <add>, %75, %cst_41 [0] : vector<8x128xf32> to vector<128xf32>
      %77 = vector.shape_cast %76 : vector<128xf32> to vector<1x128xf32>
      %78 = arith.addf %74, %77 : vector<1x128xf32>
      %c0_42 = arith.constant 0 : index
      %c0_43 = arith.constant 0 : index
      %79 = vector.load %arg14[%c0_42, %c0_43] : memref<1x128xf32, #tpu.memory_space<vmem>>, vector<1x128xf32>
      tpu.vector_store %arg14[%c0_42, %c0_43], %78 {strides = array<i32>} : memref<1x128xf32, #tpu.memory_space<vmem>>, vector<1x128xf32>,
    } else {
    }
    %true = arith.constant true
    %45 = arith.xori %10, %true : i1
    %46 = arith.andi %9, %45 : i1
    %47 = arith.extui %46 : i1 to i32
    %c0_i32_22 = arith.constant 0 : i32
    %48 = arith.cmpi ne, %47, %c0_i32_22 : i32
    scf.if %48 {
      %c0_25 = arith.constant 0 : index
      %c0_26 = arith.constant 0 : index
      %52 = vector.load %arg15[%c0_25, %c0_26] : memref<1x8xf32, #tpu.memory_space<vmem>>, vector<1x8xf32>
      %cst_27 = arith.constant dense<0.000000e+00> : vector<8xf32>
      %53 = vector.multi_reduction <add>, %40, %cst_27 [0] : vector<8x8xf32> to vector<8xf32>
      %54 = vector.shape_cast %53 : vector<8xf32> to vector<1x8xf32>
      %55 = arith.addf %52, %54 : vector<1x8xf32>
      %c0_28 = arith.constant 0 : index
      %c0_29 = arith.constant 0 : index
      %56 = vector.load %arg15[%c0_28, %c0_29] : memref<1x8xf32, #tpu.memory_space<vmem>>, vector<1x8xf32>
      tpu.vector_store %arg15[%c0_28, %c0_29], %55 {strides = array<i32>} : memref<1x8xf32, #tpu.memory_space<vmem>>, vector<1x8xf32>,
      %c0_30 = arith.constant 0 : index
      %c0_31 = arith.constant 0 : index
      %57 = vector.load %arg16[%c0_30, %c0_31] : memref<1x8xf32, #tpu.memory_space<vmem>>, vector<1x8xf32>
      %cst_32 = arith.constant dense<0.000000e+00> : vector<8xf32>
      %58 = vector.multi_reduction <add>, %41, %cst_32 [0] : vector<8x8xf32> to vector<8xf32>
      %59 = vector.shape_cast %58 : vector<8xf32> to vector<1x8xf32>
      %60 = arith.addf %57, %59 : vector<1x8xf32>
      %c0_33 = arith.constant 0 : index
      %c0_34 = arith.constant 0 : index
      %61 = vector.load %arg16[%c0_33, %c0_34] : memref<1x8xf32, #tpu.memory_space<vmem>>, vector<1x8xf32>
      tpu.vector_store %arg16[%c0_33, %c0_34], %60 {strides = array<i32>} : memref<1x8xf32, #tpu.memory_space<vmem>>, vector<1x8xf32>,
    } else {
    }
    %c0_i32_23 = arith.constant 0 : i32
    %49 = arith.cmpi eq, %arg1, %c0_i32_23 : i32
    %50 = arith.extui %49 : i1 to i32
    %c0_i32_24 = arith.constant 0 : i32
    %51 = arith.cmpi ne, %50, %c0_i32_24 : i32
    scf.if %51 {
      %c0_25 = arith.constant 0 : index
      %c0_26 = arith.constant 0 : index
      %52 = vector.load %arg14[%c0_25, %c0_26] : memref<1x128xf32, #tpu.memory_space<vmem>>, vector<1x128xf32>
      %53 = vector.shape_cast %52 : vector<1x128xf32> to vector<1x1x128xf32>
      %cst_27 = arith.constant dense<0.000000e+00> : vector<1xf32>
      %54 = vector.multi_reduction <add>, %53, %cst_27 [1, 2] : vector<1x1x128xf32> to vector<1xf32>
      %55 = vector.shape_cast %54 : vector<1xf32> to vector<1x1x1xf32>
      %56 = vector.extract %55[0, 0, 0] : f32 from vector<1x1x1xf32>
      %c0_28 = arith.constant 0 : index
      %c0_29 = arith.constant 0 : index
      %57 = vector.load %arg15[%c0_28, %c0_29] : memref<1x8xf32, #tpu.memory_space<vmem>>, vector<1x8xf32>
      %58 = vector.shape_cast %57 : vector<1x8xf32> to vector<1x1x8xf32>
      %cst_30 = arith.constant dense<0.000000e+00> : vector<1xf32>
      %59 = vector.multi_reduction <add>, %58, %cst_30 [1, 2] : vector<1x1x8xf32> to vector<1xf32>
      %60 = vector.shape_cast %59 : vector<1xf32> to vector<1x1x1xf32>
      %61 = vector.extract %60[0, 0, 0] : f32 from vector<1x1x1xf32>
      %c0_31 = arith.constant 0 : index
      %c0_32 = arith.constant 0 : index
      %62 = vector.load %arg16[%c0_31, %c0_32] : memref<1x8xf32, #tpu.memory_space<vmem>>, vector<1x8xf32>
      %63 = vector.shape_cast %62 : vector<1x8xf32> to vector<1x1x8xf32>
      %cst_33 = arith.constant dense<0.000000e+00> : vector<1xf32>
      %64 = vector.multi_reduction <add>, %63, %cst_33 [1, 2] : vector<1x1x8xf32> to vector<1xf32>
      %65 = vector.shape_cast %64 : vector<1xf32> to vector<1x1x1xf32>
      %66 = vector.extract %65[0, 0, 0] : f32 from vector<1x1x1xf32>
      %67 = tpu.iota {dimensions = array<i32: 1>} : vector<1x8x128xi32>
      %c0_i32_34 = arith.constant 0 : i32
      %68 = vector.broadcast %c0_i32_34 : i32 to vector<1x8x128xi32>
      %69 = arith.cmpi eq, %67, %68 : vector<1x8x128xi32>
      %c1_i32_35 = arith.constant 1 : i32
      %70 = vector.broadcast %c1_i32_35 : i32 to vector<1x8x128xi32>
      %71 = arith.cmpi eq, %67, %70 : vector<1x8x128xi32>
      %c2_i32 = arith.constant 2 : i32
      %72 = vector.broadcast %c2_i32 : i32 to vector<1x8x128xi32>
      %73 = arith.cmpi eq, %67, %72 : vector<1x8x128xi32>
      %cst_36 = arith.constant 0.000000e+00 : f32
      %74 = vector.broadcast %66 : f32 to vector<1x8x128xf32>
      %75 = vector.broadcast %cst_36 : f32 to vector<1x8x128xf32>
      %76 = arith.select %73, %74, %75 : vector<1x8x128xi1>, vector<1x8x128xf32>
      %77 = vector.broadcast %61 : f32 to vector<1x8x128xf32>
      %78 = arith.select %71, %77, %76 : vector<1x8x128xi1>, vector<1x8x128xf32>
      %79 = vector.broadcast %56 : f32 to vector<1x8x128xf32>
      %80 = arith.select %69, %79, %78 : vector<1x8x128xi1>, vector<1x8x128xf32>
      %c0_37 = arith.constant 0 : index
      %c0_38 = arith.constant 0 : index
      %c0_39 = arith.constant 0 : index
      %81 = vector.load %arg13[%c0_37, %c0_38, %c0_39] : memref<1x8x128xf32, #tpu.memory_space<vmem>>, vector<1x8x128xf32>
      tpu.vector_store %arg13[%c0_37, %c0_38, %c0_39], %80 {strides = array<i32>} : memref<1x8x128xf32, #tpu.memory_space<vmem>>, vector<1x8x128xf32>,
    } else {
    }
    return
  }
  func.func @transform_0(%arg0: i32, %arg1: i32, %arg2: memref<2x1xi32, #tpu.memory_space<smem>>, %arg3: memref<2x1xi32, #tpu.memory_space<smem>>, %arg4: memref<2x1xi32, #tpu.memory_space<smem>>) -> (i32, i32) {
    %0 = arith.index_cast %arg0 : i32 to index
    %1 = arith.index_cast %arg1 : i32 to index
    %2 = memref.load %arg2[%0, %1] : memref<2x1xi32, #tpu.memory_space<smem>>
    %c0_i32 = arith.constant 0 : i32
    %c0_i32_0 = arith.constant 0 : i32
    return %2, %c0_i32 : i32, i32
  }
  func.func @transform_1(%arg0: i32, %arg1: i32, %arg2: memref<2x1xi32, #tpu.memory_space<smem>>, %arg3: memref<2x1xi32, #tpu.memory_space<smem>>, %arg4: memref<2x1xi32, #tpu.memory_space<smem>>) -> (i32, i32) {
    %0 = arith.index_cast %arg0 : i32 to index
    %1 = arith.index_cast %arg1 : i32 to index
    %2 = memref.load %arg3[%0, %1] : memref<2x1xi32, #tpu.memory_space<smem>>
    %c0_i32 = arith.constant 0 : i32
    %c0_i32_0 = arith.constant 0 : i32
    return %2, %c0_i32 : i32, i32
  }
  func.func @transform_2(%arg0: i32, %arg1: i32, %arg2: memref<2x1xi32, #tpu.memory_space<smem>>, %arg3: memref<2x1xi32, #tpu.memory_space<smem>>, %arg4: memref<2x1xi32, #tpu.memory_space<smem>>) -> (i32, i32) {
    %0 = arith.index_cast %arg0 : i32 to index
    %1 = arith.index_cast %arg1 : i32 to index
    %2 = memref.load %arg2[%0, %1] : memref<2x1xi32, #tpu.memory_space<smem>>
    %c0_i32 = arith.constant 0 : i32
    %c0_i32_0 = arith.constant 0 : i32
    return %2, %c0_i32 : i32, i32
  }
  func.func @transform_3(%arg0: i32, %arg1: i32, %arg2: memref<2x1xi32, #tpu.memory_space<smem>>, %arg3: memref<2x1xi32, #tpu.memory_space<smem>>, %arg4: memref<2x1xi32, #tpu.memory_space<smem>>) -> (i32, i32) {
    %0 = arith.index_cast %arg0 : i32 to index
    %1 = arith.index_cast %arg1 : i32 to index
    %2 = memref.load %arg3[%0, %1] : memref<2x1xi32, #tpu.memory_space<smem>>
    %c0_i32 = arith.constant 0 : i32
    %c0_i32_0 = arith.constant 0 : i32
    return %2, %c0_i32 : i32, i32
  }
  func.func @transform_4(%arg0: i32, %arg1: i32, %arg2: memref<2x1xi32, #tpu.memory_space<smem>>, %arg3: memref<2x1xi32, #tpu.memory_space<smem>>, %arg4: memref<2x1xi32, #tpu.memory_space<smem>>) -> (i32, i32) {
    %0 = arith.index_cast %arg0 : i32 to index
    %1 = arith.index_cast %arg1 : i32 to index
    %2 = memref.load %arg2[%0, %1] : memref<2x1xi32, #tpu.memory_space<smem>>
    %c0_i32 = arith.constant 0 : i32
    %c0_i32_0 = arith.constant 0 : i32
    return %2, %c0_i32 : i32, i32
  }
  func.func @transform_5(%arg0: i32, %arg1: i32, %arg2: memref<2x1xi32, #tpu.memory_space<smem>>, %arg3: memref<2x1xi32, #tpu.memory_space<smem>>, %arg4: memref<2x1xi32, #tpu.memory_space<smem>>) -> (i32, i32) {
    %0 = arith.index_cast %arg0 : i32 to index
    %1 = arith.index_cast %arg1 : i32 to index
    %2 = memref.load %arg3[%0, %1] : memref<2x1xi32, #tpu.memory_space<smem>>
    %c0_i32 = arith.constant 0 : i32
    %c0_i32_0 = arith.constant 0 : i32
    return %c0_i32, %2 : i32, i32
  }
  func.func @transform_6(%arg0: i32, %arg1: i32, %arg2: memref<2x1xi32, #tpu.memory_space<smem>>, %arg3: memref<2x1xi32, #tpu.memory_space<smem>>, %arg4: memref<2x1xi32, #tpu.memory_space<smem>>) -> (i32, i32) {
    %0 = arith.index_cast %arg0 : i32 to index
    %1 = arith.index_cast %arg1 : i32 to index
    %2 = memref.load %arg2[%0, %1] : memref<2x1xi32, #tpu.memory_space<smem>>
    %c0_i32 = arith.constant 0 : i32
    %c0_i32_0 = arith.constant 0 : i32
    return %2, %c0_i32 : i32, i32
  }
  func.func @transform_7(%arg0: i32, %arg1: i32, %arg2: memref<2x1xi32, #tpu.memory_space<smem>>, %arg3: memref<2x1xi32, #tpu.memory_space<smem>>, %arg4: memref<2x1xi32, #tpu.memory_space<smem>>) -> (i32, i32) {
    %0 = arith.index_cast %arg0 : i32 to index
    %1 = arith.index_cast %arg1 : i32 to index
    %2 = memref.load %arg3[%0, %1] : memref<2x1xi32, #tpu.memory_space<smem>>
    %c0_i32 = arith.constant 0 : i32
    %c0_i32_0 = arith.constant 0 : i32
    return %c0_i32, %2 : i32, i32
  }
  func.func @transform_8(%arg0: i32, %arg1: i32, %arg2: memref<2x1xi32, #tpu.memory_space<smem>>, %arg3: memref<2x1xi32, #tpu.memory_space<smem>>, %arg4: memref<2x1xi32, #tpu.memory_space<smem>>) -> (i32, i32, i32) {
    %c0_i32 = arith.constant 0 : i32
    %c0_i32_0 = arith.constant 0 : i32
    %c0_i32_1 = arith.constant 0 : i32
    return %arg0, %c0_i32, %c0_i32_0 : i32, i32, i32
  }
}

</mosaic_0001>

<llo_original>
// kernel: auloss.1
$region0: #{auloss.1}
  #allocation0 [shape = 'u32[]', space=smem, size = 0x4, offset = 0x4, fixed_abs, tag = 'smem constant byte address 0x4 - core index']
  #allocation1 [shape = 'u32[144,128]{1,0:T(1,128)}', space=vmem, size = 0x12000, scoped, tag = 'internal scratch']
  #allocation2 [shape = 'f32[1,128]{1,0:T(1,128)}', space=vmem, size = 0x200, scoped, tag = 'scratch operand']
  #allocation3 [shape = 'f32[1,8]{1,0:T(1,128)}', space=vmem, size = 0x200, scoped, tag = 'scratch operand']
  #allocation4 [shape = 'f32[1,8]{1,0:T(1,128)}', space=vmem, size = 0x200, scoped, tag = 'scratch operand']
  #allocation5 [shape = 's32[1]{0}', space=sflag, size = 0x4, scoped, tag = 'scoped memory for auloss.1']
  #allocation6 [shape = 'u8[1024]{0}', space=smem, size = 0x400, scoped, tag = 'prefetched SMEM operand 0']
  #allocation7 [shape = 'u8[1024]{0}', space=smem, size = 0x400, scoped, tag = 'prefetched SMEM operand 1']
  #allocation8 [shape = 'u8[1024]{0}', space=smem, size = 0x400, scoped, tag = 'prefetched SMEM operand 2']
  %s0 = inlined_call_operand.vmem [shape: s32[2,1], index: 0, kind: input, shape index: {}, may-alias: {0,1}]
  %s1 = inlined_call_operand.vmem [shape: s32[2,1], index: 1, kind: input, shape index: {}, may-alias: {0,1}]
  %s2 = inlined_call_operand.vmem [shape: s32[2,1], index: 2, kind: input, shape index: {}]
  %s3 = inlined_call_operand.vmem [shape: f32[8,128], index: 3, kind: input, shape index: {}, may-alias: {3,4}]
  %s4 = inlined_call_operand.vmem [shape: f32[8,128], index: 4, kind: input, shape index: {}, may-alias: {3,4}]
  %s5 = inlined_call_operand.vmem [shape: f32[8,128], index: 5, kind: input, shape index: {}, may-alias: {5,6}]
  %s6 = inlined_call_operand.vmem [shape: f32[8,128], index: 6, kind: input, shape index: {}, may-alias: {5,6}]
  %s7 = inlined_call_operand.vmem [shape: f32[8,1], index: 7, kind: input, shape index: {}]
  %s8 = inlined_call_operand.vmem [shape: f32[1,8], index: 8, kind: input, shape index: {}]
  %s9 = inlined_call_operand.vmem [shape: f32[8,1], index: 9, kind: input, shape index: {}]
  %s10 = inlined_call_operand.vmem [shape: f32[1,8], index: 10, kind: input, shape index: {}]
  %s11 = inlined_call_operand.vmem [shape: f32[2,8,128], index: 11, kind: output, shape index: {}]
  %s12 = sld [smem:[#allocation0]]
  $region81: #{auloss.1} parent=0
    _
  %s14 = ssub.s32 1, %s12
  %s15 = scalar_select 0, %s14, %s12
  %s16 = sshll.u32 %s0, 4
  %s17 = int_to_ptr.vmem [resolvable:$true] %s16
  %19 = dma.vmem_to_smem %s17, 32, [#allocation6], [#allocation5]
  %s20 = sshll.u32 %s1, 4
  %s21 = int_to_ptr.vmem [resolvable:$true] %s20
  %23 = dma.vmem_to_smem %s21, 32, [#allocation7], [#allocation5]
  %s24 = sshll.u32 %s2, 4
  %s25 = int_to_ptr.vmem [resolvable:$true] %s24
  %27 = dma.vmem_to_smem %s25, 32, [#allocation8], [#allocation5]
  %28 = dma.done [#allocation5], 96
  %29 = sfence
  loop: start=0, step=1, limit=4
  $region2: #{auloss.1} parent=0 // loop_pre_header
    _
  $region3: #{auloss.1} parent=0 // loop_header
    %s31 = sphi 0, %s35
    %p32 = scmp.ge.s32.totalorder %s31, 4
    %s38 = sphi 0, %s50
    %s39 = sphi 0, %s46
    %s40 = sphi 0, %s38
    %s41 = sphi 0, %s39
    %s42 = sphi 0, %s40
    %s43 = sphi 0, %s41
    %s69 = sphi 0, %s71
    %s72 = sphi 0, %s69
    %s73 = sphi 0, %s72
    %s89 = sphi 0, %s73
    %s111 = sphi 0, %s113
    %s114 = sphi 0, %s111
    %s115 = sphi 0, %s114
    %s131 = sphi 0, %s115
    %s153 = sphi 0, %s155
    %s156 = sphi 0, %s153
    %s157 = sphi 0, %s156
    %s173 = sphi 0, %s157
    %s195 = sphi 0, %s197
    %s198 = sphi 0, %s195
    %s199 = sphi 0, %s198
    %s215 = sphi 0, %s199
    %s237 = sphi 0, %s239
    %s240 = sphi 0, %s237
    %s241 = sphi 0, %s240
    %s257 = sphi 0, %s241
    %s279 = sphi 0, %s281
    %s282 = sphi 0, %s279
    %s283 = sphi 0, %s282
    %s299 = sphi 0, %s283
    %s321 = sphi 0, %s323
    %s324 = sphi 0, %s321
    %s325 = sphi 0, %s324
    %s341 = sphi 0, %s325
    %s363 = sphi 0, %s365
    %s366 = sphi 0, %s363
    %s367 = sphi 0, %s366
    %s383 = sphi 0, %s367
    %s389 = sphi 0, %s391
    %s392 = sphi 0, %s389
    %s393 = sphi 0, %s392
    %s409 = sphi 0, %s393
  $region4: #{auloss.1} parent=0 // loop_header_branch
    %34 = sbr.rel (%p32) target = $region8
  $region5: #{auloss.1} parent=0 // loop_body
    %s36 = ssub.s32 %s31, 1
    %s37 = ssub.s32 %s31, 2
    %s44 = sadd.s32 1, %s39
    %p45 = scmp.ge.s32.totalorder %s44, 1
    %s46 = scalar_select %p45, 0, %s44
    %s47 = sadd.s32 1, %s38
    %s48 = scalar_select %p45, %s47, %s38
    %p49 = scmp.ge.s32.totalorder %s48, 2
    %s50 = scalar_select %p49, 0, %s48
    %s51 = sshra.s32 %s39, 7
    %s52 = sand.u32 %s39, 127
    %s53 = sadd.s32 %s51, %s38
    %s54 = smul.u32 %s53, 128
    %s55 = sshra.s32 %s39, 7
    %s56 = sand.u32 %s39, 127
    %s57 = sadd.s32 %s54, %s56
    %s58 = sld [smem:[#allocation6 + %s57]]
    %s59 = sshra.s32 %s46, 7
    %s60 = sand.u32 %s46, 127
    %s61 = sadd.s32 %s59, %s50
    %s62 = smul.u32 %s61, 128
    %s63 = sshra.s32 %s46, 7
    %s64 = sand.u32 %s46, 127
    %s65 = sadd.s32 %s62, %s64
    %s66 = sld [smem:[#allocation6 + %s65]]
    %s67 = ssub.s32 %s58, %s66
    %p68 = scmp.eq.s32.totalorder %s67, 0
    %s70 = sadd.s32 %s69, 1
    %s71 = scalar_select %p68, %s69, %s70
    %p74 = pneg %p68
    %p75 = scmp.eq.s32.totalorder %s31, 1
    %p76 = por %p74, %p75
    %p77 = scmp.ne.s32.totalorder %s69, %s72
    %p78 = scmp.eq.s32.totalorder %s31, 0
    %p79 = por %p77, %p78
    %p80 = scmp.ne.s32.totalorder %s69, %s72
    %p81 = scmp.eq.s32.totalorder %s36, 1
    %p82 = por %p80, %p81
    %p83 = scmp.ne.s32.totalorder %s72, %s73
    %p84 = scmp.eq.s32.totalorder %s36, 0
    %p85 = por %p83, %p84
    %p86 = scmp.ne.s32.totalorder %s72, %s73
    %p87 = scmp.eq.s32.totalorder %s37, 1
    %p88 = por %p86, %p87
    %p90 = scmp.ne.s32.totalorder %s73, %s89
    %p91 = scmp.eq.s32.totalorder %s37, 0
    %p92 = por %p90, %p91
    %s93 = sshra.s32 %s39, 7
    %s94 = sand.u32 %s39, 127
    %s95 = sadd.s32 %s93, %s38
    %s96 = smul.u32 %s95, 128
    %s97 = sshra.s32 %s39, 7
    %s98 = sand.u32 %s39, 127
    %s99 = sadd.s32 %s96, %s98
    %s100 = sld [smem:[#allocation7 + %s99]]
    %s101 = sshra.s32 %s46, 7
    %s102 = sand.u32 %s46, 127
    %s103 = sadd.s32 %s101, %s50
    %s104 = smul.u32 %s103, 128
    %s105 = sshra.s32 %s46, 7
    %s106 = sand.u32 %s46, 127
    %s107 = sadd.s32 %s104, %s106
    %s108 = sld [smem:[#allocation7 + %s107]]
    %s109 = ssub.s32 %s100, %s108
    %p110 = scmp.eq.s32.totalorder %s109, 0
    %s112 = sadd.s32 %s111, 1
    %s113 = scalar_select %p110, %s111, %s112
    %p116 = pneg %p110
    %p117 = scmp.eq.s32.totalorder %s31, 1
    %p118 = por %p116, %p117
    %p119 = scmp.ne.s32.totalorder %s111, %s114
    %p120 = scmp.eq.s32.totalorder %s31, 0
    %p121 = por %p119, %p120
    %p122 = scmp.ne.s32.totalorder %s111, %s114
    %p123 = scmp.eq.s32.totalorder %s36, 1
    %p124 = por %p122, %p123
    %p125 = scmp.ne.s32.totalorder %s114, %s115
    %p126 = scmp.eq.s32.totalorder %s36, 0
    %p127 = por %p125, %p126
    %p128 = scmp.ne.s32.totalorder %s114, %s115
    %p129 = scmp.eq.s32.totalorder %s37, 1
    %p130 = por %p128, %p129
    %p132 = scmp.ne.s32.totalorder %s115, %s131
    %p133 = scmp.eq.s32.totalorder %s37, 0
    %p134 = por %p132, %p133
    %s135 = sshra.s32 %s39, 7
    %s136 = sand.u32 %s39, 127
    %s137 = sadd.s32 %s135, %s38
    %s138 = smul.u32 %s137, 128
    %s139 = sshra.s32 %s39, 7
    %s140 = sand.u32 %s39, 127
    %s141 = sadd.s32 %s138, %s140
    %s142 = sld [smem:[#allocation6 + %s141]]
    %s143 = sshra.s32 %s46, 7
    %s144 = sand.u32 %s46, 127
    %s145 = sadd.s32 %s143, %s50
    %s146 = smul.u32 %s145, 128
    %s147 = sshra.s32 %s46, 7
    %s148 = sand.u32 %s46, 127
    %s149 = sadd.s32 %s146, %s148
    %s150 = sld [smem:[#allocation6 + %s149]]
    %s151 = ssub.s32 %s142, %s150
    %p152 = scmp.eq.s32.totalorder %s151, 0
    %s154 = sadd.s32 %s153, 1
    %s155 = scalar_select %p152, %s153, %s154
    %p158 = pneg %p152
    %p159 = scmp.eq.s32.totalorder %s31, 1
    %p160 = por %p158, %p159
    %p161 = scmp.ne.s32.totalorder %s153, %s156
    %p162 = scmp.eq.s32.totalorder %s31, 0
    %p163 = por %p161, %p162
    %p164 = scmp.ne.s32.totalorder %s153, %s156
    %p165 = scmp.eq.s32.totalorder %s36, 1
    %p166 = por %p164, %p165
    %p167 = scmp.ne.s32.totalorder %s156, %s157
    %p168 = scmp.eq.s32.totalorder %s36, 0
    %p169 = por %p167, %p168
    %p170 = scmp.ne.s32.totalorder %s156, %s157
    %p171 = scmp.eq.s32.totalorder %s37, 1
    %p172 = por %p170, %p171
    %p174 = scmp.ne.s32.totalorder %s157, %s173
    %p175 = scmp.eq.s32.totalorder %s37, 0
    %p176 = por %p174, %p175
    %s177 = sshra.s32 %s39, 7
    %s178 = sand.u32 %s39, 127
    %s179 = sadd.s32 %s177, %s38
    %s180 = smul.u32 %s179, 128
    %s181 = sshra.s32 %s39, 7
    %s182 = sand.u32 %s39, 127
    %s183 = sadd.s32 %s180, %s182
    %s184 = sld [smem:[#allocation7 + %s183]]
    %s185 = sshra.s32 %s46, 7
    %s186 = sand.u32 %s46, 127
    %s187 = sadd.s32 %s185, %s50
    %s188 = smul.u32 %s187, 128
    %s189 = sshra.s32 %s46, 7
    %s190 = sand.u32 %s46, 127
    %s191 = sadd.s32 %s188, %s190
    %s192 = sld [smem:[#allocation7 + %s191]]
    %s193 = ssub.s32 %s184, %s192
    %p194 = scmp.eq.s32.totalorder %s193, 0
    %s196 = sadd.s32 %s195, 1
    %s197 = scalar_select %p194, %s195, %s196
    %p200 = pneg %p194
    %p201 = scmp.eq.s32.totalorder %s31, 1
    %p202 = por %p200, %p201
    %p203 = scmp.ne.s32.totalorder %s195, %s198
    %p204 = scmp.eq.s32.totalorder %s31, 0
    %p205 = por %p203, %p204
    %p206 = scmp.ne.s32.totalorder %s195, %s198
    %p207 = scmp.eq.s32.totalorder %s36, 1
    %p208 = por %p206, %p207
    %p209 = scmp.ne.s32.totalorder %s198, %s199
    %p210 = scmp.eq.s32.totalorder %s36, 0
    %p211 = por %p209, %p210
    %p212 = scmp.ne.s32.totalorder %s198, %s199
    %p213 = scmp.eq.s32.totalorder %s37, 1
    %p214 = por %p212, %p213
    %p216 = scmp.ne.s32.totalorder %s199, %s215
    %p217 = scmp.eq.s32.totalorder %s37, 0
    %p218 = por %p216, %p217
    %s219 = sshra.s32 %s39, 7
    %s220 = sand.u32 %s39, 127
    %s221 = sadd.s32 %s219, %s38
    %s222 = smul.u32 %s221, 128
    %s223 = sshra.s32 %s39, 7
    %s224 = sand.u32 %s39, 127
    %s225 = sadd.s32 %s222, %s224
    %s226 = sld [smem:[#allocation6 + %s225]]
    %s227 = sshra.s32 %s46, 7
    %s228 = sand.u32 %s46, 127
    %s229 = sadd.s32 %s227, %s50
    %s230 = smul.u32 %s229, 128
    %s231 = sshra.s32 %s46, 7
    %s232 = sand.u32 %s46, 127
    %s233 = sadd.s32 %s230, %s232
    %s234 = sld [smem:[#allocation6 + %s233]]
    %s235 = ssub.s32 %s226, %s234
    %p236 = scmp.eq.s32.totalorder %s235, 0
    %s238 = sadd.s32 %s237, 1
    %s239 = scalar_select %p236, %s237, %s238
    %p242 = pneg %p236
    %p243 = scmp.eq.s32.totalorder %s31, 1
    %p244 = por %p242, %p243
    %p245 = scmp.ne.s32.totalorder %s237, %s240
    %p246 = scmp.eq.s32.totalorder %s31, 0
    %p247 = por %p245, %p246
    %p248 = scmp.ne.s32.totalorder %s237, %s240
    %p249 = scmp.eq.s32.totalorder %s36, 1
    %p250 = por %p248, %p249
    %p251 = scmp.ne.s32.totalorder %s240, %s241
    %p252 = scmp.eq.s32.totalorder %s36, 0
    %p253 = por %p251, %p252
    %p254 = scmp.ne.s32.totalorder %s240, %s241
    %p255 = scmp.eq.s32.totalorder %s37, 1
    %p256 = por %p254, %p255
    %p258 = scmp.ne.s32.totalorder %s241, %s257
    %p259 = scmp.eq.s32.totalorder %s37, 0
    %p260 = por %p258, %p259
    %s261 = sshra.s32 %s39, 7
    %s262 = sand.u32 %s39, 127
    %s263 = sadd.s32 %s261, %s38
    %s264 = smul.u32 %s263, 128
    %s265 = sshra.s32 %s39, 7
    %s266 = sand.u32 %s39, 127
    %s267 = sadd.s32 %s264, %s266
    %s268 = sld [smem:[#allocation7 + %s267]]
    %s269 = sshra.s32 %s46, 7
    %s270 = sand.u32 %s46, 127
    %s271 = sadd.s32 %s269, %s50
    %s272 = smul.u32 %s271, 128
    %s273 = sshra.s32 %s46, 7
    %s274 = sand.u32 %s46, 127
    %s275 = sadd.s32 %s272, %s274
    %s276 = sld [smem:[#allocation7 + %s275]]
    %s277 = ssub.s32 %s268, %s276
    %p278 = scmp.eq.s32.totalorder %s277, 0
    %s280 = sadd.s32 %s279, 1
    %s281 = scalar_select %p278, %s279, %s280
    %p284 = pneg %p278
    %p285 = scmp.eq.s32.totalorder %s31, 1
    %p286 = por %p284, %p285
    %p287 = scmp.ne.s32.totalorder %s279, %s282
    %p288 = scmp.eq.s32.totalorder %s31, 0
    %p289 = por %p287, %p288
    %p290 = scmp.ne.s32.totalorder %s279, %s282
    %p291 = scmp.eq.s32.totalorder %s36, 1
    %p292 = por %p290, %p291
    %p293 = scmp.ne.s32.totalorder %s282, %s283
    %p294 = scmp.eq.s32.totalorder %s36, 0
    %p295 = por %p293, %p294
    %p296 = scmp.ne.s32.totalorder %s282, %s283
    %p297 = scmp.eq.s32.totalorder %s37, 1
    %p298 = por %p296, %p297
    %p300 = scmp.ne.s32.totalorder %s283, %s299
    %p301 = scmp.eq.s32.totalorder %s37, 0
    %p302 = por %p300, %p301
    %s303 = sshra.s32 %s39, 7
    %s304 = sand.u32 %s39, 127
    %s305 = sadd.s32 %s303, %s38
    %s306 = smul.u32 %s305, 128
    %s307 = sshra.s32 %s39, 7
    %s308 = sand.u32 %s39, 127
    %s309 = sadd.s32 %s306, %s308
    %s310 = sld [smem:[#allocation6 + %s309]]
    %s311 = sshra.s32 %s46, 7
    %s312 = sand.u32 %s46, 127
    %s313 = sadd.s32 %s311, %s50
    %s314 = smul.u32 %s313, 128
    %s315 = sshra.s32 %s46, 7
    %s316 = sand.u32 %s46, 127
    %s317 = sadd.s32 %s314, %s316
    %s318 = sld [smem:[#allocation6 + %s317]]
    %s319 = ssub.s32 %s310, %s318
    %p320 = scmp.eq.s32.totalorder %s319, 0
    %s322 = sadd.s32 %s321, 1
    %s323 = scalar_select %p320, %s321, %s322
    %p326 = pneg %p320
    %p327 = scmp.eq.s32.totalorder %s31, 1
    %p328 = por %p326, %p327
    %p329 = scmp.ne.s32.totalorder %s321, %s324
    %p330 = scmp.eq.s32.totalorder %s31, 0
    %p331 = por %p329, %p330
    %p332 = scmp.ne.s32.totalorder %s321, %s324
    %p333 = scmp.eq.s32.totalorder %s36, 1
    %p334 = por %p332, %p333
    %p335 = scmp.ne.s32.totalorder %s324, %s325
    %p336 = scmp.eq.s32.totalorder %s36, 0
    %p337 = por %p335, %p336
    %p338 = scmp.ne.s32.totalorder %s324, %s325
    %p339 = scmp.eq.s32.totalorder %s37, 1
    %p340 = por %p338, %p339
    %p342 = scmp.ne.s32.totalorder %s325, %s341
    %p343 = scmp.eq.s32.totalorder %s37, 0
    %p344 = por %p342, %p343
    %s345 = sshra.s32 %s39, 7
    %s346 = sand.u32 %s39, 127
    %s347 = sadd.s32 %s345, %s38
    %s348 = smul.u32 %s347, 128
    %s349 = sshra.s32 %s39, 7
    %s350 = sand.u32 %s39, 127
    %s351 = sadd.s32 %s348, %s350
    %s352 = sld [smem:[#allocation7 + %s351]]
    %s353 = sshra.s32 %s46, 7
    %s354 = sand.u32 %s46, 127
    %s355 = sadd.s32 %s353, %s50
    %s356 = smul.u32 %s355, 128
    %s357 = sshra.s32 %s46, 7
    %s358 = sand.u32 %s46, 127
    %s359 = sadd.s32 %s356, %s358
    %s360 = sld [smem:[#allocation7 + %s359]]
    %s361 = ssub.s32 %s352, %s360
    %p362 = scmp.eq.s32.totalorder %s361, 0
    %s364 = sadd.s32 %s363, 1
    %s365 = scalar_select %p362, %s363, %s364
    %p368 = pneg %p362
    %p369 = scmp.eq.s32.totalorder %s31, 1
    %p370 = por %p368, %p369
    %p371 = scmp.ne.s32.totalorder %s363, %s366
    %p372 = scmp.eq.s32.totalorder %s31, 0
    %p373 = por %p371, %p372
    %p374 = scmp.ne.s32.totalorder %s363, %s366
    %p375 = scmp.eq.s32.totalorder %s36, 1
    %p376 = por %p374, %p375
    %p377 = scmp.ne.s32.totalorder %s366, %s367
    %p378 = scmp.eq.s32.totalorder %s36, 0
    %p379 = por %p377, %p378
    %p380 = scmp.ne.s32.totalorder %s366, %s367
    %p381 = scmp.eq.s32.totalorder %s37, 1
    %p382 = por %p380, %p381
    %p384 = scmp.ne.s32.totalorder %s367, %s383
    %p385 = scmp.eq.s32.totalorder %s37, 0
    %p386 = por %p384, %p385
    %s387 = ssub.s32 %s38, %s50
    %p388 = scmp.eq.s32.totalorder %s387, 0
    %s390 = sadd.s32 %s389, 1
    %s391 = scalar_select %p388, %s389, %s390
    %p394 = pneg %p388
    %p395 = scmp.eq.s32.totalorder %s31, 1
    %p396 = por %p394, %p395
    %p397 = scmp.ne.s32.totalorder %s389, %s392
    %p398 = scmp.eq.s32.totalorder %s31, 0
    %p399 = por %p397, %p398
    %p400 = scmp.ne.s32.totalorder %s389, %s392
    %p401 = scmp.eq.s32.totalorder %s36, 1
    %p402 = por %p400, %p401
    %p403 = scmp.ne.s32.totalorder %s392, %s393
    %p404 = scmp.eq.s32.totalorder %s36, 0
    %p405 = por %p403, %p404
    %p406 = scmp.ne.s32.totalorder %s392, %s393
    %p407 = scmp.eq.s32.totalorder %s37, 1
    %p408 = por %p406, %p407
    %p410 = scmp.ne.s32.totalorder %s393, %s409
    %p411 = scmp.eq.s32.totalorder %s37, 0
    %p412 = por %p410, %p411
    %p413 = scmp.le.s32.totalorder 1, %s31
    %p414 = scmp.lt.s32.totalorder %s31, 3
    %p415 = pnand %p413, %p414
    %p416 = pneg %p415
    // Predicated region
    $region9: #{auloss.1} parent=5 // pred_check
      _
    $region10: #{auloss.1} parent=5 // pred_check_branch
      %418 = sbr.rel (%p415) target = $region12
    $region11: #{auloss.1} parent=5 // pred_region
      %s419 = ssub.s32 %s31, 1
    $region12: #{auloss.1} parent=5 // pred_fallthru
      _
    %p420 = scmp.lt.s32.totalorder %s31, 2
    // Predicated region
    $region13: #{auloss.1} parent=5 // pred_check
      %p421 = pneg %p420
    $region14: #{auloss.1} parent=5 // pred_check_branch
      %423 = sbr.rel (%p421) target = $region16
    $region15: #{auloss.1} parent=5 // pred_region
      // Predicated region
      $region17: #{auloss.1} parent=15 // pred_check
        %p424 = pneg %p79
      $region18: #{auloss.1} parent=15 // pred_check_branch
        %426 = sbr.rel (%p424) target = $region20
      $region19: #{auloss.1} parent=15 // pred_region
        %s427 = sshra.s32 %s39, 7
        %s428 = sand.u32 %s39, 127
        %s429 = sadd.s32 %s427, %s38
        %s430 = smul.u32 %s429, 128
        %s431 = sshra.s32 %s39, 7
        %s432 = sand.u32 %s39, 127
        %s433 = sadd.s32 %s430, %s432
        %s434 = sld [smem:[#allocation6 + %s433]]
        %p435 = scmp.lt.s32.totalorder %s434, 0
        %s436 = scalar_select %p435, %s434, 0
        %s437 = smul.addr %s436, 8
        %s438 = scalar_lea.vmem %s3, %s437
        %s439 = sshra.s32 %s39, 7
        %s440 = sand.u32 %s39, 127
        %s441 = sadd.s32 %s439, %s38
        %s442 = smul.u32 %s441, 128
        %s443 = sshra.s32 %s39, 7
        %s444 = sand.u32 %s39, 127
        %s445 = sadd.s32 %s442, %s444
        %s446 = sld [smem:[#allocation6 + %s445]]
      $region20: #{auloss.1} parent=15 // pred_fallthru
        _
      // Predicated region
      $region21: #{auloss.1} parent=15 // pred_check
        %p447 = pneg %p121
      $region22: #{auloss.1} parent=15 // pred_check_branch
        %449 = sbr.rel (%p447) target = $region24
      $region23: #{auloss.1} parent=15 // pred_region
        %s450 = sshra.s32 %s39, 7
        %s451 = sand.u32 %s39, 127
        %s452 = sadd.s32 %s450, %s38
        %s453 = smul.u32 %s452, 128
        %s454 = sshra.s32 %s39, 7
        %s455 = sand.u32 %s39, 127
        %s456 = sadd.s32 %s453, %s455
        %s457 = sld [smem:[#allocation7 + %s456]]
        %p458 = scmp.lt.s32.totalorder %s457, 0
        %s459 = scalar_select %p458, %s457, 0
        %s460 = smul.addr %s459, 8
        %s461 = scalar_lea.vmem %s4, %s460
        %s462 = sshra.s32 %s39, 7
        %s463 = sand.u32 %s39, 127
        %s464 = sadd.s32 %s462, %s38
        %s465 = smul.u32 %s464, 128
        %s466 = sshra.s32 %s39, 7
        %s467 = sand.u32 %s39, 127
        %s468 = sadd.s32 %s465, %s467
        %s469 = sld [smem:[#allocation7 + %s468]]
      $region24: #{auloss.1} parent=15 // pred_fallthru
        _
      // Predicated region
      $region25: #{auloss.1} parent=15 // pred_check
        %p470 = pneg %p163
      $region26: #{auloss.1} parent=15 // pred_check_branch
        %472 = sbr.rel (%p470) target = $region28
      $region27: #{auloss.1} parent=15 // pred_region
        %s473 = sshra.s32 %s39, 7
        %s474 = sand.u32 %s39, 127
        %s475 = sadd.s32 %s473, %s38
        %s476 = smul.u32 %s475, 128
        %s477 = sshra.s32 %s39, 7
        %s478 = sand.u32 %s39, 127
        %s479 = sadd.s32 %s476, %s478
        %s480 = sld [smem:[#allocation6 + %s479]]
        %p481 = scmp.lt.s32.totalorder %s480, 0
        %s482 = scalar_select %p481, %s480, 0
        %s483 = smul.addr %s482, 8
        %s484 = scalar_lea.vmem %s5, %s483
        %s485 = sshra.s32 %s39, 7
        %s486 = sand.u32 %s39, 127
        %s487 = sadd.s32 %s485, %s38
        %s488 = smul.u32 %s487, 128
        %s489 = sshra.s32 %s39, 7
        %s490 = sand.u32 %s39, 127
        %s491 = sadd.s32 %s488, %s490
        %s492 = sld [smem:[#allocation6 + %s491]]
      $region28: #{auloss.1} parent=15 // pred_fallthru
        _
      // Predicated region
      $region29: #{auloss.1} parent=15 // pred_check
        %p493 = pneg %p205
      $region30: #{auloss.1} parent=15 // pred_check_branch
        %495 = sbr.rel (%p493) target = $region32
      $region31: #{auloss.1} parent=15 // pred_region
        %s496 = sshra.s32 %s39, 7
        %s497 = sand.u32 %s39, 127
        %s498 = sadd.s32 %s496, %s38
        %s499 = smul.u32 %s498, 128
        %s500 = sshra.s32 %s39, 7
        %s501 = sand.u32 %s39, 127
        %s502 = sadd.s32 %s499, %s501
        %s503 = sld [smem:[#allocation7 + %s502]]
        %p504 = scmp.lt.s32.totalorder %s503, 0
        %s505 = scalar_select %p504, %s503, 0
        %s506 = smul.addr %s505, 8
        %s507 = scalar_lea.vmem %s6, %s506
        %s508 = sshra.s32 %s39, 7
        %s509 = sand.u32 %s39, 127
        %s510 = sadd.s32 %s508, %s38
        %s511 = smul.u32 %s510, 128
        %s512 = sshra.s32 %s39, 7
        %s513 = sand.u32 %s39, 127
        %s514 = sadd.s32 %s511, %s513
        %s515 = sld [smem:[#allocation7 + %s514]]
      $region32: #{auloss.1} parent=15 // pred_fallthru
        _
      // Predicated region
      $region33: #{auloss.1} parent=15 // pred_check
        %p516 = pneg %p247
      $region34: #{auloss.1} parent=15 // pred_check_branch
        %518 = sbr.rel (%p516) target = $region36
      $region35: #{auloss.1} parent=15 // pred_region
        %s519 = sshra.s32 %s39, 7
        %s520 = sand.u32 %s39, 127
        %s521 = sadd.s32 %s519, %s38
        %s522 = smul.u32 %s521, 128
        %s523 = sshra.s32 %s39, 7
        %s524 = sand.u32 %s39, 127
        %s525 = sadd.s32 %s522, %s524
        %s526 = sld [smem:[#allocation6 + %s525]]
        %p527 = scmp.lt.s32.totalorder %s526, 0
        %s528 = scalar_select %p527, %s526, 0
        %s529 = smul.addr %s528, 8
        %s530 = scalar_lea.vmem %s7, %s529
        %s531 = sshra.s32 %s39, 7
        %s532 = sand.u32 %s39, 127
        %s533 = sadd.s32 %s531, %s38
        %s534 = smul.u32 %s533, 128
        %s535 = sshra.s32 %s39, 7
        %s536 = sand.u32 %s39, 127
        %s537 = sadd.s32 %s534, %s536
        %s538 = sld [smem:[#allocation6 + %s537]]
      $region36: #{auloss.1} parent=15 // pred_fallthru
        _
      // Predicated region
      $region37: #{auloss.1} parent=15 // pred_check
        %p539 = pneg %p289
      $region38: #{auloss.1} parent=15 // pred_check_branch
        %541 = sbr.rel (%p539) target = $region40
      $region39: #{auloss.1} parent=15 // pred_region
        %s542 = sshra.s32 %s39, 7
        %s543 = sand.u32 %s39, 127
        %s544 = sadd.s32 %s542, %s38
        %s545 = smul.u32 %s544, 128
        %s546 = sshra.s32 %s39, 7
        %s547 = sand.u32 %s39, 127
        %s548 = sadd.s32 %s545, %s547
        %s549 = sld [smem:[#allocation7 + %s548]]
        %p550 = scmp.lt.s32.totalorder %s549, 0
        %s551 = scalar_select %p550, %s549, 0
        %s552 = scalar_lea.vmem %s8, %s551
        %s553 = sshra.s32 %s39, 7
        %s554 = sand.u32 %s39, 127
        %s555 = sadd.s32 %s553, %s38
        %s556 = smul.u32 %s555, 128
        %s557 = sshra.s32 %s39, 7
        %s558 = sand.u32 %s39, 127
        %s559 = sadd.s32 %s556, %s558
        %s560 = sld [smem:[#allocation7 + %s559]]
      $region40: #{auloss.1} parent=15 // pred_fallthru
        _
      // Predicated region
      $region41: #{auloss.1} parent=15 // pred_check
        %p561 = pneg %p331
      $region42: #{auloss.1} parent=15 // pred_check_branch
        %563 = sbr.rel (%p561) target = $region44
      $region43: #{auloss.1} parent=15 // pred_region
        %s564 = sshra.s32 %s39, 7
        %s565 = sand.u32 %s39, 127
        %s566 = sadd.s32 %s564, %s38
        %s567 = smul.u32 %s566, 128
        %s568 = sshra.s32 %s39, 7
        %s569 = sand.u32 %s39, 127
        %s570 = sadd.s32 %s567, %s569
        %s571 = sld [smem:[#allocation6 + %s570]]
        %p572 = scmp.lt.s32.totalorder %s571, 0
        %s573 = scalar_select %p572, %s571, 0
        %s574 = smul.addr %s573, 8
        %s575 = scalar_lea.vmem %s9, %s574
        %s576 = sshra.s32 %s39, 7
        %s577 = sand.u32 %s39, 127
        %s578 = sadd.s32 %s576, %s38
        %s579 = smul.u32 %s578, 128
        %s580 = sshra.s32 %s39, 7
        %s581 = sand.u32 %s39, 127
        %s582 = sadd.s32 %s579, %s581
        %s583 = sld [smem:[#allocation6 + %s582]]
      $region44: #{auloss.1} parent=15 // pred_fallthru
        _
      // Predicated region
      $region45: #{auloss.1} parent=15 // pred_check
        %p584 = pneg %p373
      $region46: #{auloss.1} parent=15 // pred_check_branch
        %586 = sbr.rel (%p584) target = $region48
      $region47: #{auloss.1} parent=15 // pred_region
        %s587 = sshra.s32 %s39, 7
        %s588 = sand.u32 %s39, 127
        %s589 = sadd.s32 %s587, %s38
        %s590 = smul.u32 %s589, 128
        %s591 = sshra.s32 %s39, 7
        %s592 = sand.u32 %s39, 127
        %s593 = sadd.s32 %s590, %s592
        %s594 = sld [smem:[#allocation7 + %s593]]
        %p595 = scmp.lt.s32.totalorder %s594, 0
        %s596 = scalar_select %p595, %s594, 0
        %s597 = scalar_lea.vmem %s10, %s596
        %s598 = sshra.s32 %s39, 7
        %s599 = sand.u32 %s39, 127
        %s600 = sadd.s32 %s598, %s38
        %s601 = smul.u32 %s600, 128
        %s602 = sshra.s32 %s39, 7
        %s603 = sand.u32 %s39, 127
        %s604 = sadd.s32 %s601, %s603
        %s605 = sld [smem:[#allocation7 + %s604]]
      $region48: #{auloss.1} parent=15 // pred_fallthru
        _
    $region16: #{auloss.1} parent=5 // pred_fallthru
      _
    %p606 = scmp.le.s32.totalorder 1, %s31
    %p607 = scmp.lt.s32.totalorder %s31, 3
    %p608 = pnand %p606, %p607
    %p609 = pneg %p608
    // Predicated region
    $region49: #{auloss.1} parent=5 // pred_check
      _
    $region50: #{auloss.1} parent=5 // pred_check_branch
      %611 = sbr.rel (%p608) target = $region52
    $region51: #{auloss.1} parent=5 // pred_region
      %s612 = ssub.s32 %s31, 1
      %s613 = sshra.s32 %s41, 7
      %s614 = sand.u32 %s41, 127
      %s615 = sadd.s32 %s613, %s40
      %s616 = smul.u32 %s615, 128
      %s617 = sshra.s32 %s41, 7
      %s618 = sand.u32 %s41, 127
      %s619 = sadd.s32 %s616, %s618
      %s620 = sld [smem:[#allocation6 + %s619]]
      %p621 = scmp.lt.s32.totalorder %s620, 0
      %s622 = scalar_select %p621, %s620, 0
      %s623 = smul.addr %s622, 8
      %s624 = scalar_lea.vmem %s3, %s623
      %p625 = pneg %p85
      %p626 = pneg %p82
      %s627 = sshra.s32 %s41, 7
      %s628 = sand.u32 %s41, 127
      %s629 = sadd.s32 %s627, %s40
      %s630 = smul.u32 %s629, 128
      %s631 = sshra.s32 %s41, 7
      %s632 = sand.u32 %s41, 127
      %s633 = sadd.s32 %s630, %s632
      %s634 = sld [smem:[#allocation7 + %s633]]
      %p635 = scmp.lt.s32.totalorder %s634, 0
      %s636 = scalar_select %p635, %s634, 0
      %s637 = smul.addr %s636, 8
      %s638 = scalar_lea.vmem %s4, %s637
      %p639 = pneg %p127
      %p640 = pneg %p124
      %s641 = sshra.s32 %s41, 7
      %s642 = sand.u32 %s41, 127
      %s643 = sadd.s32 %s641, %s40
      %s644 = smul.u32 %s643, 128
      %s645 = sshra.s32 %s41, 7
      %s646 = sand.u32 %s41, 127
      %s647 = sadd.s32 %s644, %s646
      %s648 = sld [smem:[#allocation6 + %s647]]
      %p649 = scmp.lt.s32.totalorder %s648, 0
      %s650 = scalar_select %p649, %s648, 0
      %s651 = smul.addr %s650, 8
      %s652 = scalar_lea.vmem %s5, %s651
      %p653 = pneg %p169
      %p654 = pneg %p166
      %s655 = sshra.s32 %s41, 7
      %s656 = sand.u32 %s41, 127
      %s657 = sadd.s32 %s655, %s40
      %s658 = smul.u32 %s657, 128
      %s659 = sshra.s32 %s41, 7
      %s660 = sand.u32 %s41, 127
      %s661 = sadd.s32 %s658, %s660
      %s662 = sld [smem:[#allocation7 + %s661]]
      %p663 = scmp.lt.s32.totalorder %s662, 0
      %s664 = scalar_select %p663, %s662, 0
      %s665 = smul.addr %s664, 8
      %s666 = scalar_lea.vmem %s6, %s665
      %p667 = pneg %p211
      %p668 = pneg %p208
      %s669 = sshra.s32 %s41, 7
      %s670 = sand.u32 %s41, 127
      %s671 = sadd.s32 %s669, %s40
      %s672 = smul.u32 %s671, 128
      %s673 = sshra.s32 %s41, 7
      %s674 = sand.u32 %s41, 127
      %s675 = sadd.s32 %s672, %s674
      %s676 = sld [smem:[#allocation6 + %s675]]
      %p677 = scmp.lt.s32.totalorder %s676, 0
      %s678 = scalar_select %p677, %s676, 0
      %s679 = smul.addr %s678, 8
      %s680 = scalar_lea.vmem %s7, %s679
      %p681 = pneg %p253
      %p682 = pneg %p250
      %s683 = sshra.s32 %s41, 7
      %s684 = sand.u32 %s41, 127
      %s685 = sadd.s32 %s683, %s40
      %s686 = smul.u32 %s685, 128
      %s687 = sshra.s32 %s41, 7
      %s688 = sand.u32 %s41, 127
      %s689 = sadd.s32 %s686, %s688
      %s690 = sld [smem:[#allocation7 + %s689]]
      %p691 = scmp.lt.s32.totalorder %s690, 0
      %s692 = scalar_select %p691, %s690, 0
      %s693 = scalar_lea.vmem %s8, %s692
      %p694 = pneg %p295
      %p695 = pneg %p292
      %s696 = sshra.s32 %s41, 7
      %s697 = sand.u32 %s41, 127
      %s698 = sadd.s32 %s696, %s40
      %s699 = smul.u32 %s698, 128
      %s700 = sshra.s32 %s41, 7
      %s701 = sand.u32 %s41, 127
      %s702 = sadd.s32 %s699, %s701
      %s703 = sld [smem:[#allocation6 + %s702]]
      %p704 = scmp.lt.s32.totalorder %s703, 0
      %s705 = scalar_select %p704, %s703, 0
      %s706 = smul.addr %s705, 8
      %s707 = scalar_lea.vmem %s9, %s706
      %p708 = pneg %p337
      %p709 = pneg %p334
      %s710 = sshra.s32 %s41, 7
      %s711 = sand.u32 %s41, 127
      %s712 = sadd.s32 %s710, %s40
      %s713 = smul.u32 %s712, 128
      %s714 = sshra.s32 %s41, 7
      %s715 = sand.u32 %s41, 127
      %s716 = sadd.s32 %s713, %s715
      %s717 = sld [smem:[#allocation7 + %s716]]
      %p718 = scmp.lt.s32.totalorder %s717, 0
      %s719 = scalar_select %p718, %s717, 0
      %s720 = scalar_lea.vmem %s10, %s719
      %p721 = pneg %p379
      %p722 = pneg %p376
      %p723 = pneg %p405
      %p724 = pneg %p402
      %p725 = scmp.lt.s32.totalorder %s40, 1
      %s726 = scalar_select %p725, %s40, 1
      %s727 = smul.addr %s726, 8
      %s728 = scalar_lea.vmem %s11, %s727
      %s729 = sshra.s32 %s41, 7
      %s730 = sand.u32 %s41, 127
      %s731 = sadd.s32 %s729, %s40
      %s732 = smul.u32 %s731, 128
      %s733 = sshra.s32 %s41, 7
      %s734 = sand.u32 %s41, 127
      %s735 = sadd.s32 %s732, %s734
      %s736 = sld [smem:[#allocation6 + %s735]]
      %p737 = scmp.lt.s32.totalorder %s736, 0
      %s738 = scalar_select %p737, %s736, 0
      %s739 = smul.addr %s738, 8
      %s740 = scalar_lea.vmem %s3, %s739
      %s741 = sshra.s32 %s41, 7
      %s742 = sand.u32 %s41, 127
      %s743 = sadd.s32 %s741, %s40
      %s744 = smul.u32 %s743, 128
      %s745 = sshra.s32 %s41, 7
      %s746 = sand.u32 %s41, 127
      %s747 = sadd.s32 %s744, %s746
      %s748 = sld [smem:[#allocation6 + %s747]]
      %s749 = sshra.s32 %s41, 7
      %s750 = sand.u32 %s41, 127
      %s751 = sadd.s32 %s749, %s40
      %s752 = smul.u32 %s751, 128
      %s753 = sshra.s32 %s41, 7
      %s754 = sand.u32 %s41, 127
      %s755 = sadd.s32 %s752, %s754
      %s756 = sld [smem:[#allocation7 + %s755]]
      %p757 = scmp.lt.s32.totalorder %s756, 0
      %s758 = scalar_select %p757, %s756, 0
      %s759 = smul.addr %s758, 8
      %s760 = scalar_lea.vmem %s4, %s759
      %s761 = sshra.s32 %s41, 7
      %s762 = sand.u32 %s41, 127
      %s763 = sadd.s32 %s761, %s40
      %s764 = smul.u32 %s763, 128
      %s765 = sshra.s32 %s41, 7
      %s766 = sand.u32 %s41, 127
      %s767 = sadd.s32 %s764, %s766
      %s768 = sld [smem:[#allocation7 + %s767]]
      %s769 = sshra.s32 %s41, 7
      %s770 = sand.u32 %s41, 127
      %s771 = sadd.s32 %s769, %s40
      %s772 = smul.u32 %s771, 128
      %s773 = sshra.s32 %s41, 7
      %s774 = sand.u32 %s41, 127
      %s775 = sadd.s32 %s772, %s774
      %s776 = sld [smem:[#allocation6 + %s775]]
      %p777 = scmp.lt.s32.totalorder %s776, 0
      %s778 = scalar_select %p777, %s776, 0
      %s779 = smul.addr %s778, 8
      %s780 = scalar_lea.vmem %s5, %s779
      %s781 = sshra.s32 %s41, 7
      %s782 = sand.u32 %s41, 127
      %s783 = sadd.s32 %s781, %s40
      %s784 = smul.u32 %s783, 128
      %s785 = sshra.s32 %s41, 7
      %s786 = sand.u32 %s41, 127
      %s787 = sadd.s32 %s784, %s786
      %s788 = sld [smem:[#allocation6 + %s787]]
      %s789 = sshra.s32 %s41, 7
      %s790 = sand.u32 %s41, 127
      %s791 = sadd.s32 %s789, %s40
      %s792 = smul.u32 %s791, 128
      %s793 = sshra.s32 %s41, 7
      %s794 = sand.u32 %s41, 127
      %s795 = sadd.s32 %s792, %s794
      %s796 = sld [smem:[#allocation7 + %s795]]
      %p797 = scmp.lt.s32.totalorder %s796, 0
      %s798 = scalar_select %p797, %s796, 0
      %s799 = smul.addr %s798, 8
      %s800 = scalar_lea.vmem %s6, %s799
      %s801 = sshra.s32 %s41, 7
      %s802 = sand.u32 %s41, 127
      %s803 = sadd.s32 %s801, %s40
      %s804 = smul.u32 %s803, 128
      %s805 = sshra.s32 %s41, 7
      %s806 = sand.u32 %s41, 127
      %s807 = sadd.s32 %s804, %s806
      %s808 = sld [smem:[#allocation7 + %s807]]
      %s809 = sshra.s32 %s41, 7
      %s810 = sand.u32 %s41, 127
      %s811 = sadd.s32 %s809, %s40
      %s812 = smul.u32 %s811, 128
      %s813 = sshra.s32 %s41, 7
      %s814 = sand.u32 %s41, 127
      %s815 = sadd.s32 %s812, %s814
      %s816 = sld [smem:[#allocation6 + %s815]]
      %p817 = scmp.lt.s32.totalorder %s816, 0
      %s818 = scalar_select %p817, %s816, 0
      %s819 = smul.addr %s818, 8
      %s820 = scalar_lea.vmem %s7, %s819
      %s821 = sshra.s32 %s41, 7
      %s822 = sand.u32 %s41, 127
      %s823 = sadd.s32 %s821, %s40
      %s824 = smul.u32 %s823, 128
      %s825 = sshra.s32 %s41, 7
      %s826 = sand.u32 %s41, 127
      %s827 = sadd.s32 %s824, %s826
      %s828 = sld [smem:[#allocation6 + %s827]]
      %s829 = sshra.s32 %s41, 7
      %s830 = sand.u32 %s41, 127
      %s831 = sadd.s32 %s829, %s40
      %s832 = smul.u32 %s831, 128
      %s833 = sshra.s32 %s41, 7
      %s834 = sand.u32 %s41, 127
      %s835 = sadd.s32 %s832, %s834
      %s836 = sld [smem:[#allocation7 + %s835]]
      %p837 = scmp.lt.s32.totalorder %s836, 0
      %s838 = scalar_select %p837, %s836, 0
      %s839 = scalar_lea.vmem %s8, %s838
      %s840 = sshra.s32 %s41, 7
      %s841 = sand.u32 %s41, 127
      %s842 = sadd.s32 %s840, %s40
      %s843 = smul.u32 %s842, 128
      %s844 = sshra.s32 %s41, 7
      %s845 = sand.u32 %s41, 127
      %s846 = sadd.s32 %s843, %s845
      %s847 = sld [smem:[#allocation7 + %s846]]
      %s848 = sshra.s32 %s41, 7
      %s849 = sand.u32 %s41, 127
      %s850 = sadd.s32 %s848, %s40
      %s851 = smul.u32 %s850, 128
      %s852 = sshra.s32 %s41, 7
      %s853 = sand.u32 %s41, 127
      %s854 = sadd.s32 %s851, %s853
      %s855 = sld [smem:[#allocation6 + %s854]]
      %p856 = scmp.lt.s32.totalorder %s855, 0
      %s857 = scalar_select %p856, %s855, 0
      %s858 = smul.addr %s857, 8
      %s859 = scalar_lea.vmem %s9, %s858
      %s860 = sshra.s32 %s41, 7
      %s861 = sand.u32 %s41, 127
      %s862 = sadd.s32 %s860, %s40
      %s863 = smul.u32 %s862, 128
      %s864 = sshra.s32 %s41, 7
      %s865 = sand.u32 %s41, 127
      %s866 = sadd.s32 %s863, %s865
      %s867 = sld [smem:[#allocation6 + %s866]]
      %s868 = sshra.s32 %s41, 7
      %s869 = sand.u32 %s41, 127
      %s870 = sadd.s32 %s868, %s40
      %s871 = smul.u32 %s870, 128
      %s872 = sshra.s32 %s41, 7
      %s873 = sand.u32 %s41, 127
      %s874 = sadd.s32 %s871, %s873
      %s875 = sld [smem:[#allocation7 + %s874]]
      %p876 = scmp.lt.s32.totalorder %s875, 0
      %s877 = scalar_select %p876, %s875, 0
      %s878 = scalar_lea.vmem %s10, %s877
      %s879 = sshra.s32 %s41, 7
      %s880 = sand.u32 %s41, 127
      %s881 = sadd.s32 %s879, %s40
      %s882 = smul.u32 %s881, 128
      %s883 = sshra.s32 %s41, 7
      %s884 = sand.u32 %s41, 127
      %s885 = sadd.s32 %s882, %s884
      %s886 = sld [smem:[#allocation7 + %s885]]
      %p887 = scmp.lt.s32.totalorder %s40, 1
      %s888 = scalar_select %p887, %s40, 1
      %s889 = smul.addr %s888, 8
      %s890 = scalar_lea.vmem %s11, %s889
      %s891 = sshra.s32 %s41, 7
      %s892 = sand.u32 %s41, 127
      %s893 = sadd.s32 %s891, %s40
      %s894 = smul.u32 %s893, 128
      %s895 = sshra.s32 %s41, 7
      %s896 = sand.u32 %s41, 127
      %s897 = sadd.s32 %s894, %s896
      %s898 = sld [smem:[#allocation6 + %s897]]
      %s899 = sld [smem:[#allocation7 + %s897]]
      %s900 = sld [smem:[#allocation8 + %s897]]
      %p901 = scmp.eq.s32.totalorder %s900, 1
      %p902 = scmp.eq.s32.totalorder %s898, %s899
      %p903 = scmp.eq.s32.totalorder %s41, 0
      // Predicated region
      $region53: #{auloss.1} parent=51 // pred_check
        %p904 = pneg %p903
      $region54: #{auloss.1} parent=51 // pred_check_branch
        %906 = sbr.rel (%p904) target = $region56
      $region55: #{auloss.1} parent=51 // pred_region
        %907 = vst [vmem:[#allocation2] sm:$0x1] 0.0
        %vm908 = vcmask 57344
        %909 = vst.msk [vmem:[#allocation3] sm:$0x1] %vm908, 0.0
        %910 = vst.msk [vmem:[#allocation4] sm:$0x1] %vm908, 0.0
      $region56: #{auloss.1} parent=51 // pred_fallthru
        _
      %v911 = vld [vmem:[%s740] sm:$0xff]
      %v912 = vld [vmem:[%s760] sm:$0xff]
      %v913 = vld [vmem:[%s780] sm:$0xff]
      %v914 = vld [vmem:[%s800] sm:$0xff]
      %915 = vmatprep.subr.mxu0 0.0
      %916 = vmatpush1.xpose.msra.mxu0 %v912
      %917 = vmatprep.subr.mxu0 0.0
      %918 = vmatpush1.xpose.msra.mxu0 0.0
      %919 = vmatprep.subr.mxu0 0.0
      %920 = vmatpush1.xpose.msra.mxu0 0.0
      %921 = vmatprep.subr.mxu0 0.0
      %922 = vmatpush1.xpose.msra.mxu0 0.0
      %923 = vmatprep.subr.mxu0 0.0
      %924 = vmatpush1.xpose.msra.mxu0 0.0
      %925 = vmatprep.subr.mxu0 0.0
      %926 = vmatpush1.xpose.msra.mxu0 0.0
      %927 = vmatprep.subr.mxu0 0.0
      %928 = vmatpush1.xpose.msra.mxu0 0.0
      %929 = vmatprep.subr.mxu0 0.0
      %930 = vmatpush1.xpose.msra.mxu0 0.0
      %931 = vmatprep.subr.mxu0 0.0
      %932 = vmatpush1.xpose.msra.mxu0 0.0
      %933 = vmatprep.subr.mxu0 0.0
      %934 = vmatpush1.xpose.msra.mxu0 0.0
      %935 = vmatprep.subr.mxu0 0.0
      %936 = vmatpush1.xpose.msra.mxu0 0.0
      %937 = vmatprep.subr.mxu0 0.0
      %938 = vmatpush1.xpose.msra.mxu0 0.0
      %939 = vmatprep.subr.mxu0 0.0
      %940 = vmatpush1.xpose.msra.mxu0 0.0
      %941 = vmatprep.subr.mxu0 0.0
      %942 = vmatpush1.xpose.msra.mxu0 0.0
      %943 = vmatprep.subr.mxu0 0.0
      %944 = vmatpush1.xpose.msra.mxu0 0.0
      %945 = vmatprep.subr.mxu0 0.0
      %946 = vmatpush1.xpose.msra.mxu0 0.0
      %947 = vmatprep.subr.mxu0 0.0
      %948 = vmatpush1.xpose.msra.mxu0 0.0
      %949 = vmatprep.subr.mxu0 0.0
      %950 = vmatpush1.xpose.msra.mxu0 0.0
      %951 = vmatprep.subr.mxu0 0.0
      %952 = vmatpush1.xpose.msra.mxu0 0.0
      %953 = vmatprep.subr.mxu0 0.0
      %954 = vmatpush1.xpose.msra.mxu0 0.0
      %955 = vmatprep.subr.mxu0 0.0
      %956 = vmatpush1.xpose.msra.mxu0 0.0
      %957 = vmatprep.subr.mxu0 0.0
      %958 = vmatpush1.xpose.msra.mxu0 0.0
      %959 = vmatprep.subr.mxu0 0.0
      %960 = vmatpush1.xpose.msra.mxu0 0.0
      %961 = vmatprep.subr.mxu0 0.0
      %962 = vmatpush1.xpose.msra.mxu0 0.0
      %963 = vmatprep.subr.mxu0 0.0
      %964 = vmatpush1.xpose.msra.mxu0 0.0
      %965 = vmatprep.subr.mxu0 0.0
      %966 = vmatpush1.xpose.msra.mxu0 0.0
      %967 = vmatprep.subr.mxu0 0.0
      %968 = vmatpush1.xpose.msra.mxu0 0.0
      %969 = vmatprep.subr.mxu0 0.0
      %970 = vmatpush1.xpose.msra.mxu0 0.0
      %971 = vmatprep.subr.mxu0 0.0
      %972 = vmatpush1.xpose.msra.mxu0 0.0
      %973 = vmatprep.subr.mxu0 0.0
      %974 = vmatpush1.xpose.msra.mxu0 0.0
      %975 = vmatprep.subr.mxu0 0.0
      %976 = vmatpush1.xpose.msra.mxu0 0.0
      %977 = vmatprep.subr.mxu0 0.0
      %978 = vmatpush1.xpose.msra.mxu0 0.0
      %979 = vmatprep.mubr.f32.mxu0 0.0
      %980 = vmatmul.mubr.f32.gmra.mrb[0].mxu0 %v911
      %v981 = vpop.f32.mrb[0].mxu0
      %v982 = vadd.f32 0.0, %v981
      %v983 = vpop.f32.mrb[0].mxu0
      %984 = vdwg.mxu0
      %985 = vmatprep.subr.mxu0 0.0
      %986 = vmatpush1.xpose.msra.mxu0 %v914
      %987 = vmatprep.subr.mxu0 0.0
      %988 = vmatpush1.xpose.msra.mxu0 0.0
      %989 = vmatprep.subr.mxu0 0.0
      %990 = vmatpush1.xpose.msra.mxu0 0.0
      %991 = vmatprep.subr.mxu0 0.0
      %992 = vmatpush1.xpose.msra.mxu0 0.0
      %993 = vmatprep.subr.mxu0 0.0
      %994 = vmatpush1.xpose.msra.mxu0 0.0
      %995 = vmatprep.subr.mxu0 0.0
      %996 = vmatpush1.xpose.msra.mxu0 0.0
      %997 = vmatprep.subr.mxu0 0.0
      %998 = vmatpush1.xpose.msra.mxu0 0.0
      %999 = vmatprep.subr.mxu0 0.0
      %1000 = vmatpush1.xpose.msra.mxu0 0.0
      %1001 = vmatprep.subr.mxu0 0.0
      %1002 = vmatpush1.xpose.msra.mxu0 0.0
      %1003 = vmatprep.subr.mxu0 0.0
      %1004 = vmatpush1.xpose.msra.mxu0 0.0
      %1005 = vmatprep.subr.mxu0 0.0
      %1006 = vmatpush1.xpose.msra.mxu0 0.0
      %1007 = vmatprep.subr.mxu0 0.0
      %1008 = vmatpush1.xpose.msra.mxu0 0.0
      %1009 = vmatprep.subr.mxu0 0.0
      %1010 = vmatpush1.xpose.msra.mxu0 0.0
      %1011 = vmatprep.subr.mxu0 0.0
      %1012 = vmatpush1.xpose.msra.mxu0 0.0
      %1013 = vmatprep.subr.mxu0 0.0
      %1014 = vmatpush1.xpose.msra.mxu0 0.0
      %1015 = vmatprep.subr.mxu0 0.0
      %1016 = vmatpush1.xpose.msra.mxu0 0.0
      %1017 = vmatprep.subr.mxu0 0.0
      %1018 = vmatpush1.xpose.msra.mxu0 0.0
      %1019 = vmatprep.subr.mxu0 0.0
      %1020 = vmatpush1.xpose.msra.mxu0 0.0
      %1021 = vmatprep.subr.mxu0 0.0
      %1022 = vmatpush1.xpose.msra.mxu0 0.0
      %1023 = vmatprep.subr.mxu0 0.0
      %1024 = vmatpush1.xpose.msra.mxu0 0.0
      %1025 = vmatprep.subr.mxu0 0.0
      %1026 = vmatpush1.xpose.msra.mxu0 0.0
      %1027 = vmatprep.subr.mxu0 0.0
      %1028 = vmatpush1.xpose.msra.mxu0 0.0
      %1029 = vmatprep.subr.mxu0 0.0
      %1030 = vmatpush1.xpose.msra.mxu0 0.0
      %1031 = vmatprep.subr.mxu0 0.0
      %1032 = vmatpush1.xpose.msra.mxu0 0.0
      %1033 = vmatprep.subr.mxu0 0.0
      %1034 = vmatpush1.xpose.msra.mxu0 0.0
      %1035 = vmatprep.subr.mxu0 0.0
      %1036 = vmatpush1.xpose.msra.mxu0 0.0
      %1037 = vmatprep.subr.mxu0 0.0
      %1038 = vmatpush1.xpose.msra.mxu0 0.0
      %1039 = vmatprep.subr.mxu0 0.0
      %1040 = vmatpush1.xpose.msra.mxu0 0.0
      %1041 = vmatprep.subr.mxu0 0.0
      %1042 = vmatpush1.xpose.msra.mxu0 0.0
      %1043 = vmatprep.subr.mxu0 0.0
      %1044 = vmatpush1.xpose.msra.mxu0 0.0
      %1045 = vmatprep.subr.mxu0 0.0
      %1046 = vmatpush1.xpose.msra.mxu0 0.0
      %1047 = vmatprep.subr.mxu0 0.0
      %1048 = vmatpush1.xpose.msra.mxu0 0.0
      %1049 = vmatprep.mubr.f32.mxu0 0.0
      %1050 = vmatmul.mubr.f32.gmra.mrb[0].mxu0 %v913
      %v1051 = vpop.f32.mrb[0].mxu0
      %v1052 = vadd.f32 0.0, %v1051
      %v1053 = vpop.f32.mrb[0].mxu0
      %1054 = vdwg.mxu0
      %v1055 = vld [vmem:[%s820] sm:$0xff]
      %v1056 = vld [vmem:[%s839] sm:$0x1]
      %1058 = vset.pattern.permute.xlu0 0
      %1059 = vperm.xlu0 %1058, %v1055
      %v1060 = vpop.permute.xlu0 %1059
      %v1063 = vlaneseq
      %v1064 = vshrl.u32 %v1063, 7
      %v1065 = vsub.s32 0, %v1064
      %v1066 = vrot.slane %v1056, %v1065
      %v1068 = vadd.f32 %v1060, %v1066
      %v1069 = vmul.f32 %v982, 4.0
      %v1070 = vadd.f32 %v1068, %v1069
      %v1071 = vmin.f32 %v1070, 0.0
      %v1072 = vld [vmem:[%s859] sm:$0xff]
      %v1073 = vld [vmem:[%s878] sm:$0x1]
      %1075 = vset.pattern.permute.xlu0 0
      %1076 = vperm.xlu0 %1075, %v1072
      %v1077 = vpop.permute.xlu0 %1076
      %v1080 = vlaneseq
      %v1081 = vshrl.u32 %v1080, 7
      %v1082 = vsub.s32 0, %v1081
      %v1083 = vrot.slane %v1073, %v1082
      %v1085 = vadd.f32 %v1077, %v1083
      %v1086 = vmul.f32 %v1052, 4.0
      %v1087 = vadd.f32 %v1085, %v1086
      %v1088 = vmin.f32 %v1087, 0.0
      %v1089 = vmul.f32 %v1071, 1.442695
      %v1090 = vpow.pop %v1089
      %v1091 = vmul.f32 %v1088, 1.442695
      %v1092 = vpow.pop %v1091
      %p1093 = pnand %p901, %p902
      %p1094 = pneg %p1093
      // Predicated region
      $region57: #{auloss.1} parent=51 // pred_check
        _
      $region58: #{auloss.1} parent=51 // pred_check_branch
        %1096 = sbr.rel (%p1093) target = $region60
      $region59: #{auloss.1} parent=51 // pred_region
        %v1097 = vlaneseq
        %v1098 = vshrl.u32 %v1097, 7
        %v1099 = vlaneseq
        %v1100 = vand.u32 %v1099, 127
        %vm1101 = vcmp.ne.s32.totalorder %v1098, %v1100
        %v1102 = vld [vmem:[#allocation3] sm:$0x1]
        %v1103 = vsel %vm1101, %v1090, 0.0
        %vm1104 = vcmask 64512
        %v1105 = vsel %vm1104, %v1103, 0.0
        %v1106 = vrot.slane %v1105, 4
        %v1107 = vadd.f32 %v1105, %v1106
        %v1108 = vrot.slane %v1107, 2
        %v1109 = vadd.f32 %v1107, %v1108
        %v1110 = vrot.slane %v1109, 1
        %v1111 = vadd.f32 %v1109, %v1110
        %v1112 = vmul.f32 %v1111, 0.5
        %v1113 = vadd.f32 %v1102, %v1112
        %vm1114 = vcmask 57344
        %1115 = vst.msk [vmem:[#allocation3] sm:$0x1] %vm1114, %v1113
        %v1116 = vld [vmem:[#allocation4] sm:$0x1]
        %v1117 = vsel %vm1101, %v1092, 0.0
        %v1118 = vsel %vm1104, %v1117, 0.0
        %v1119 = vrot.slane %v1118, 4
        %v1120 = vadd.f32 %v1118, %v1119
        %v1121 = vrot.slane %v1120, 2
        %v1122 = vadd.f32 %v1120, %v1121
        %v1123 = vrot.slane %v1122, 1
        %v1124 = vadd.f32 %v1122, %v1123
        %v1125 = vmul.f32 %v1124, 0.5
        %v1126 = vadd.f32 %v1116, %v1125
        %1127 = vst.msk [vmem:[#allocation4] sm:$0x1] %vm1114, %v1126
        %v1128 = vsub.f32 %v911, %v913
        %v1129 = vld [vmem:[#allocation2] sm:$0x1]
        %v1130 = vmul.f32 %v1128, %v1128
        %v1131 = vrot.slane %v1130, 4
        %v1132 = vadd.f32 %v1130, %v1131
        %v1133 = vrot.slane %v1132, 2
        %v1134 = vadd.f32 %v1132, %v1133
        %v1135 = vrot.slane %v1134, 1
        %v1136 = vadd.f32 %v1134, %v1135
        %v1137 = vadd.f32 %v1129, %v1136
        %1138 = vst [vmem:[#allocation2] sm:$0x1] %v1137
      $region60: #{auloss.1} parent=51 // pred_fallthru
        _
      %p1139 = scmp.ne.s32.totalorder %s898, %s899
      %p1140 = pnand %p901, %p1139
      %p1141 = pneg %p1140
      // Predicated region
      $region61: #{auloss.1} parent=51 // pred_check
        _
      $region62: #{auloss.1} parent=51 // pred_check_branch
        %1143 = sbr.rel (%p1140) target = $region64
      $region63: #{auloss.1} parent=51 // pred_region
        %v1144 = vld [vmem:[#allocation3] sm:$0x1]
        %vm1145 = vcmask 64512
        %v1146 = vsel %vm1145, %v1090, 0.0
        %v1147 = vrot.slane %v1146, 4
        %v1148 = vadd.f32 %v1146, %v1147
        %v1149 = vrot.slane %v1148, 2
        %v1150 = vadd.f32 %v1148, %v1149
        %v1151 = vrot.slane %v1150, 1
        %v1152 = vadd.f32 %v1150, %v1151
        %v1153 = vadd.f32 %v1144, %v1152
        %vm1154 = vcmask 57344
        %1155 = vst.msk [vmem:[#allocation3] sm:$0x1] %vm1154, %v1153
        %v1156 = vld [vmem:[#allocation4] sm:$0x1]
        %v1157 = vsel %vm1145, %v1092, 0.0
        %v1158 = vrot.slane %v1157, 4
        %v1159 = vadd.f32 %v1157, %v1158
        %v1160 = vrot.slane %v1159, 2
        %v1161 = vadd.f32 %v1159, %v1160
        %v1162 = vrot.slane %v1161, 1
        %v1163 = vadd.f32 %v1161, %v1162
        %v1164 = vadd.f32 %v1156, %v1163
        %1165 = vst.msk [vmem:[#allocation4] sm:$0x1] %vm1154, %v1164
      $region64: #{auloss.1} parent=51 // pred_fallthru
        _
      // Predicated region
      $region65: #{auloss.1} parent=51 // pred_check
        %p1166 = pneg %p903
      $region66: #{auloss.1} parent=51 // pred_check_branch
        %1168 = sbr.rel (%p1166) target = $region68
      $region67: #{auloss.1} parent=51 // pred_region
        %v1169 = vld [vmem:[#allocation2] sm:$0x1]
        %vm1170 = vcmask 1040384
        %v1171 = vsel %vm1170, %v1169, 0.0
        %1172 = vadd.xlane.f32.xlu0 %v1171
        %v1173 = vpop.xlane.xlu0 %1172
        %v1174 = vrot.slane %v1173, 4
        %v1175 = vadd.f32 %v1173, %v1174
        %v1176 = vrot.slane %v1175, 2
        %v1177 = vadd.f32 %v1175, %v1176
        %v1178 = vrot.slane %v1177, 1
        %v1179 = vadd.f32 %v1177, %v1178
        %s1180 = vtos %v1179
        %v1181 = vld [vmem:[#allocation3] sm:$0x1]
        %vm1182 = vcmask 57344
        %v1183 = vsel %vm1182, %v1181, 0.0
        %1184 = vadd.xlane.f32.xlu0 %v1183
        %v1185 = vpop.xlane.xlu0 %1184
        %v1186 = vrot.slane %v1185, 4
        %v1187 = vadd.f32 %v1185, %v1186
        %v1188 = vrot.slane %v1187, 2
        %v1189 = vadd.f32 %v1187, %v1188
        %v1190 = vrot.slane %v1189, 1
        %v1191 = vadd.f32 %v1189, %v1190
        %s1192 = vtos %v1191
        %v1193 = vld [vmem:[#allocation4] sm:$0x1]
        %v1194 = vsel %vm1182, %v1193, 0.0
        %1195 = vadd.xlane.f32.xlu0 %v1194
        %v1196 = vpop.xlane.xlu0 %1195
        %v1197 = vrot.slane %v1196, 4
        %v1198 = vadd.f32 %v1196, %v1197
        %v1199 = vrot.slane %v1198, 2
        %v1200 = vadd.f32 %v1198, %v1199
        %v1201 = vrot.slane %v1200, 1
        %v1202 = vadd.f32 %v1200, %v1201
        %s1203 = vtos %v1202
        %v1204 = vlaneseq
        %v1205 = vshrl.u32 %v1204, 7
        %vm1206 = vcmp.eq.s32.totalorder %v1205, 0
        %vm1207 = vcmp.eq.s32.totalorder %v1205, 1
        %vm1208 = vcmp.eq.s32.totalorder %v1205, 2
        %v1209 = vstv %s1203
        %v1210 = vsel %vm1208, %v1209, 0.0
        %v1211 = vstv %s1192
        %v1212 = vsel %vm1207, %v1211, %v1210
        %v1213 = vstv %s1180
        %v1214 = vsel %vm1206, %v1213, %v1212
        %1215 = vst [vmem:[%s890] sm:$0xff] %v1214
      $region68: #{auloss.1} parent=51 // pred_fallthru
        _
      %p1216 = scmp.lt.s32.totalorder %s40, 1
      %s1217 = scalar_select %p1216, %s40, 1
      %s1218 = smul.addr %s1217, 8
      %s1219 = scalar_lea.vmem %s11, %s1218
      // Predicated region
      $region69: #{auloss.1} parent=51 // pred_check
        %p1220 = pneg %p402
      $region70: #{auloss.1} parent=51 // pred_check_branch
        %1222 = sbr.rel (%p1220) target = $region72
      $region71: #{auloss.1} parent=51 // pred_region
        _
      $region72: #{auloss.1} parent=51 // pred_fallthru
        _
    $region52: #{auloss.1} parent=5 // pred_fallthru
      _
    %p1223 = scmp.le.s32.totalorder 2, %s31
    // Predicated region
    $region73: #{auloss.1} parent=5 // pred_check
      %p1224 = pneg %p1223
    $region74: #{auloss.1} parent=5 // pred_check_branch
      %1226 = sbr.rel (%p1224) target = $region76
    $region75: #{auloss.1} parent=5 // pred_region
      %s1227 = ssub.s32 %s31, 2
      // Predicated region
      $region77: #{auloss.1} parent=75 // pred_check
        %p1228 = pneg %p408
      $region78: #{auloss.1} parent=75 // pred_check_branch
        %1230 = sbr.rel (%p1228) target = $region80
      $region79: #{auloss.1} parent=75 // pred_region
        %p1231 = scmp.lt.s32.totalorder %s42, 1
        %s1232 = scalar_select %p1231, %s42, 1
        %s1233 = smul.addr %s1232, 8
        %s1234 = scalar_lea.vmem %s11, %s1233
      $region80: #{auloss.1} parent=75 // pred_fallthru
        _
    $region76: #{auloss.1} parent=5 // pred_fallthru
      _
  $region6: #{auloss.1} parent=0 // loop_footer
    %s35 = sadd.s32 1, %s31
  $region7: #{auloss.1} parent=0 // loop_footer_branch
    %30 = sbr.rel target = $region3
  $region8: #{auloss.1} parent=0 // loop_exit
    _

</llo_original>
